<compile_context>
chip_gen: v6e
topology: v6e:2x2x1
jax: 0.10.0
libtpu: 0.0.40
codegen_flags: <defaults>
</compile_context>

<pallas_src>
import functools

import jax
import jax.numpy as jnp
from jax.experimental import pallas as pl
from jax.experimental.pallas import tpu as pltpu


def _res_conv_block_kernel(xp_ref, w_ref, b_ref, mask_ref, out_ref, *,
                           n_stages, hp, wp):
    """Whole residual conv block for one batch element on the padded flat grid.

    xp_ref   : (1, C, P)   f32  zero-padded input, P = (D+2)*(H+2)*(W+2)
    w_ref    : (n_stages, 3, C, 9*C) bf16  per-kd weights, rows ordered (kh,kw,ci)
    b_ref    : (n_stages, C, 1)      f32   bias (broadcasts over lanes)
    mask_ref : (1, P)      f32  1.0 at interior positions, 0.0 on the halo
    out_ref  : (1, C, P)         output on the padded grid (interior sliced
                                 out by the wrapper)
    """
    _, C, P = xp_ref.shape
    M = hp * wp + wp + 1                       # max |tap offset| on the flat grid
    interior = mask_ref[...] > 0.5             # (1, P) bool
    zpad = jnp.zeros((C, M), jnp.float32)

    act = xp_ref[0]                            # (C, P) f32, halo already zero

    for s in range(n_stages):                  # n_stages is small -> static unroll
        # Zero-extend along lanes so every (kd,kh,kw) tap is an in-bounds static
        # lane slice; out-of-volume taps read zeros (they only affect halo
        # outputs, which are masked below anyway).
        a_ext = jnp.concatenate([zpad, act, zpad], axis=1)     # (C, P + 2M)

        acc = jnp.zeros((C, P), jnp.float32)
        for kd in range(3):
            taps = []
            for kh in range(3):
                for kw in range(3):
                    off = M + (kd - 1) * hp * wp + (kh - 1) * wp + (kw - 1)
                    taps.append(a_ext[:, off:off + P])         # lane-offset slice
            # Stack the 9 taps along sublanes -> K = 9*C, one MXU dot per kd,
            # bf16 operands with f32 accumulation.
            operand = jnp.concatenate(taps, axis=0).astype(jnp.bfloat16)
            acc = acc + jnp.dot(w_ref[s, kd], operand,
                                preferred_element_type=jnp.float32)
        acc = acc + b_ref[s]                                   # (C,P) + (C,1)

        if s != n_stages - 1:
            # inter-stage ReLU; the interior mask re-zeroes the halo so the next
            # stage sees correct zero padding (no O(volume) re-zeroing pass).
            act = jnp.where(interior, jnp.maximum(acc, 0.0), 0.0)
        else:
            # residual add (re-read the VMEM-resident input block) + final ReLU
            res = jnp.where(interior,
                            jnp.maximum(acc + xp_ref[0], 0.0), 0.0)
            out_ref[0] = res.astype(out_ref.dtype)


def residual_conv_block(x_ncdhw, weights, biases):
    """Forward pass of ResidualConvBlock (normalization='none').

    x_ncdhw : (N, C, D, H, W) float32 (PyTorch layout)
    weights : list of (C, C, 3, 3, 3)  (Cin == Cout required by the residual add)
    biases  : list of (C,)
    returns : (N, C, D, H, W)
    """
    N, C, D, H, W = x_ncdhw.shape
    n_stages = len(weights)
    for w in weights:
        assert w.shape == (C, C, 3, 3, 3), "residual add requires Cin == Cout"

    dp, hp, wp = D + 2, H + 2, W + 2
    P = dp * hp * wp

    # Channels-first kept end-to-end (no transposes); pad the spatial dims once
    # and flatten them (contiguous reshape -> free).
    xp = jnp.pad(x_ncdhw.astype(jnp.float32),
                 ((0, 0), (0, 0), (1, 1), (1, 1), (1, 1))).reshape(N, C, P)

    # (Cout, Cin, kd, kh, kw) -> (kd, Cout, kh, kw, Cin) -> (3, Cout, 9*Cin):
    # one K=9C weight matrix per kd, rows ordered (kh, kw, ci) to match the
    # kernel's tap stacking.  bf16 for the MXU.
    wk = jnp.stack([jnp.transpose(w, (2, 0, 3, 4, 1)).reshape(3, C, 9 * C)
                    for w in weights]).astype(jnp.bfloat16)
    bk = jnp.stack([b.reshape(C, 1) for b in biases]).astype(jnp.float32)

    # Interior mask on the flattened padded grid.
    md = (jnp.arange(dp) >= 1) & (jnp.arange(dp) <= D)
    mh = (jnp.arange(hp) >= 1) & (jnp.arange(hp) <= H)
    mw = (jnp.arange(wp) >= 1) & (jnp.arange(wp) <= W)
    mask = (md[:, None, None] & mh[None, :, None] & mw[None, None, :])
    mask = mask.reshape(1, P).astype(jnp.float32)

    flops = 2 * N * D * H * W * 27 * C * C * n_stages
    bytes_accessed = 4 * (xp.size + N * C * P + mask.size + bk.size) + 2 * wk.size

    out_p = pl.pallas_call(
        functools.partial(_res_conv_block_kernel,
                          n_stages=n_stages, hp=hp, wp=wp),
        out_shape=jax.ShapeDtypeStruct((N, C, P), x_ncdhw.dtype),
        grid=(N,),
        in_specs=[
            pl.BlockSpec((1, C, P), lambda n: (n, 0, 0)),
            # Constant index_maps: fetched into VMEM once, reused across steps.
            pl.BlockSpec((n_stages, 3, C, 9 * C), lambda n: (0, 0, 0, 0)),
            pl.BlockSpec((n_stages, C, 1), lambda n: (0, 0, 0)),
            pl.BlockSpec((1, P), lambda n: (0, 0)),
        ],
        out_specs=pl.BlockSpec((1, C, P), lambda n: (n, 0, 0)),
        compiler_params=pltpu.CompilerParams(
            dimension_semantics=("parallel",),   # N>=2 keeps both v7x TCs busy
            vmem_limit_bytes=32 * 1024 * 1024,   # raise per-generation once D-tiled
        ),
        cost_estimate=pl.CostEstimate(flops=flops, transcendentals=0,
                                      bytes_accessed=bytes_accessed),
    )(xp, wk, bk, mask)

    # Slice the interior back out of the padded flat grid (wrapper-side, cheap).
    out = out_p.reshape(N, C, dp, hp, wp)[:, :, 1:D + 1, 1:H + 1, 1:W + 1]
    return out


def _reference(x_ncdhw, weights, biases):
    """Pure-JAX reference matching the PyTorch module."""
    h = x_ncdhw
    n_stages = len(weights)
    dn = jax.lax.conv_dimension_numbers(h.shape, weights[0].shape,
                                        ("NCDHW", "OIDHW", "NCDHW"))
    for i in range(n_stages):
        h = jax.lax.conv_general_dilated(
            h, weights[i], window_strides=(1, 1, 1), padding="SAME",
            dimension_numbers=dn)
        h = h + biases[i].reshape(1, -1, 1, 1, 1)
        if i != n_stages - 1:
            h = jnp.maximum(h, 0.0)
    h = h + x_ncdhw
    return jnp.maximum(h, 0.0)


if __name__ == "__main__":
    # Small shapes consistent with the module: residual add requires
    # n_filters_in == n_filters_out.
    N, C, D, H, W = 2, 4, 8, 8, 8
    n_stages = 2

    key = jax.random.PRNGKey(0)
    k_x, *k_ws = jax.random.split(key, 1 + 2 * n_stages)

    x = jax.random.normal(k_x, (N, C, D, H, W), dtype=jnp.float32)

    weights, biases = [], []
    for i in range(n_stages):
        fan_in = C * 27
        w = jax.random.normal(k_ws[2 * i], (C, C, 3, 3, 3),
                              dtype=jnp.float32) / jnp.sqrt(fan_in)
        b = jax.random.normal(k_ws[2 * i + 1], (C,), dtype=jnp.float32) * 0.1
        weights.append(w)
        biases.append(b)

    # Round test data to bf16-representable values so the bf16 MXU operands in
    # the kernel add no operand-rounding error vs. the f32 reference.
    _rt = lambda a: a.astype(jnp.bfloat16).astype(jnp.float32)
    x = _rt(x)
    weights = [_rt(w) for w in weights]
    biases = [_rt(b) for b in biases]

    fwd = jax.jit(residual_conv_block)
    out = jax.block_until_ready(fwd(x, weights, biases))

    ref = _reference(x, weights, biases)
    assert out.shape == (N, C, D, H, W)
    max_err = float(jnp.max(jnp.abs(out - ref)))
    assert jnp.allclose(out, ref, rtol=1e-2, atol=1e-2), max_err

    print("KERNEL_OK")
</pallas_src>

<mosaic_0001>
module attributes {stable_mosaic.version = 11 : i64} {
  func.func @_res_conv_block_kernel(%arg0: i32, %arg1: memref<1x4x1000xf32, #tpu.memory_space<vmem>>, %arg2: memref<2x3x4x36xbf16, #tpu.memory_space<vmem>>, %arg3: memref<2x4x1xf32, #tpu.memory_space<vmem>>, %arg4: memref<1x1000xf32, #tpu.memory_space<vmem>>, %arg5: memref<1x4x1000xf32, #tpu.memory_space<vmem>>) attributes {dimension_semantics = [#tpu.dimension_semantics<parallel>], iteration_bounds = array<i64: 2>, scalar_prefetch = 0 : i64, scratch_operands = 0 : i64, tpu.core_type = #tpu.core_type<tc>, window_params = [{transform_indices = @transform_0, window_bounds = array<i64: 1, 4, 1000>}, {pipeline_mode = #tpu.pipeline_mode<synchronous>, transform_indices = @transform_1, window_bounds = array<i64: 2, 3, 4, 36>}, {pipeline_mode = #tpu.pipeline_mode<synchronous>, transform_indices = @transform_2, window_bounds = array<i64: 2, 4, 1>}, {pipeline_mode = #tpu.pipeline_mode<synchronous>, transform_indices = @transform_3, window_bounds = array<i64: 1, 1000>}, {transform_indices = @transform_4, window_bounds = array<i64: 1, 4, 1000>}]} {
    %c0 = arith.constant 0 : index
    %c0_0 = arith.constant 0 : index
    %0 = vector.load %arg4[%c0, %c0_0] : memref<1x1000xf32, #tpu.memory_space<vmem>>, vector<1x1000xf32>
    %cst = arith.constant 5.000000e-01 : f32
    %1 = vector.broadcast %cst : f32 to vector<1x1000xf32>
    %2 = arith.cmpf ogt, %0, %1 : vector<1x1000xf32>
    %cst_1 = arith.constant 0.000000e+00 : f32
    %3 = vector.broadcast %cst_1 : f32 to vector<4x111xf32>
    %c0_2 = arith.constant 0 : index
    %c0_3 = arith.constant 0 : index
    %c0_4 = arith.constant 0 : index
    %4 = vector.load %arg1[%c0_2, %c0_3, %c0_4] : memref<1x4x1000xf32, #tpu.memory_space<vmem>>, vector<1x4x1000xf32>
    %5 = vector.shape_cast %4 : vector<1x4x1000xf32> to vector<4x1000xf32>
    %6 = tpu.concatenate %3, %5, %3 in 1 : vector<4x111xf32>, vector<4x1000xf32>, vector<4x111xf32> -> vector<4x1222xf32>
    %cst_5 = arith.constant 0.000000e+00 : f32
    %7 = vector.broadcast %cst_5 : f32 to vector<4x1000xf32>
    %8 = vector.extract_strided_slice %6 {offsets = [0, 0], sizes = [4, 1000], strides = [1, 1]} : vector<4x1222xf32> to vector<4x1000xf32>
    %9 = vector.extract_strided_slice %6 {offsets = [0, 1], sizes = [4, 1000], strides = [1, 1]} : vector<4x1222xf32> to vector<4x1000xf32>
    %10 = vector.extract_strided_slice %6 {offsets = [0, 2], sizes = [4, 1000], strides = [1, 1]} : vector<4x1222xf32> to vector<4x1000xf32>
    %11 = vector.extract_strided_slice %6 {offsets = [0, 10], sizes = [4, 1000], strides = [1, 1]} : vector<4x1222xf32> to vector<4x1000xf32>
    %12 = vector.extract_strided_slice %6 {offsets = [0, 11], sizes = [4, 1000], strides = [1, 1]} : vector<4x1222xf32> to vector<4x1000xf32>
    %13 = vector.extract_strided_slice %6 {offsets = [0, 12], sizes = [4, 1000], strides = [1, 1]} : vector<4x1222xf32> to vector<4x1000xf32>
    %14 = vector.extract_strided_slice %6 {offsets = [0, 20], sizes = [4, 1000], strides = [1, 1]} : vector<4x1222xf32> to vector<4x1000xf32>
    %15 = vector.extract_strided_slice %6 {offsets = [0, 21], sizes = [4, 1000], strides = [1, 1]} : vector<4x1222xf32> to vector<4x1000xf32>
    %16 = vector.extract_strided_slice %6 {offsets = [0, 22], sizes = [4, 1000], strides = [1, 1]} : vector<4x1222xf32> to vector<4x1000xf32>
    %17 = tpu.concatenate %8, %9, %10, %11, %12, %13, %14, %15, %16 in 0 : vector<4x1000xf32>, vector<4x1000xf32>, vector<4x1000xf32>, vector<4x1000xf32>, vector<4x1000xf32>, vector<4x1000xf32>, vector<4x1000xf32>, vector<4x1000xf32>, vector<4x1000xf32> -> vector<36x1000xf32>
    %18 = arith.truncf %17 : vector<36x1000xf32> to vector<36x1000xbf16>
    %c0_6 = arith.constant 0 : index
    %c0_7 = arith.constant 0 : index
    %c0_8 = arith.constant 0 : index
    %c0_9 = arith.constant 0 : index
    %19 = vector.load %arg2[%c0_6, %c0_7, %c0_8, %c0_9] : memref<2x3x4x36xbf16, #tpu.memory_space<vmem>>, vector<1x1x4x36xbf16>
    %20 = vector.shape_cast %19 : vector<1x1x4x36xbf16> to vector<4x36xbf16>
    %cst_10 = arith.constant dense<0.000000e+00> : vector<4x1000xf32>
    %21 = tpu.matmul %20, %18, %cst_10 {dimension_numbers = #tpu.dot_dimension_numbers<[1], [0], [0], [1], [0, 0, 1, 1], [], []>} : vector<4x36xbf16>, vector<36x1000xbf16>, vector<4x1000xf32> -> vector<4x1000xf32>
    %22 = arith.addf %7, %21 : vector<4x1000xf32>
    %23 = vector.extract_strided_slice %6 {offsets = [0, 100], sizes = [4, 1000], strides = [1, 1]} : vector<4x1222xf32> to vector<4x1000xf32>
    %24 = vector.extract_strided_slice %6 {offsets = [0, 101], sizes = [4, 1000], strides = [1, 1]} : vector<4x1222xf32> to vector<4x1000xf32>
    %25 = vector.extract_strided_slice %6 {offsets = [0, 102], sizes = [4, 1000], strides = [1, 1]} : vector<4x1222xf32> to vector<4x1000xf32>
    %26 = vector.extract_strided_slice %6 {offsets = [0, 110], sizes = [4, 1000], strides = [1, 1]} : vector<4x1222xf32> to vector<4x1000xf32>
    %27 = vector.extract_strided_slice %6 {offsets = [0, 111], sizes = [4, 1000], strides = [1, 1]} : vector<4x1222xf32> to vector<4x1000xf32>
    %28 = vector.extract_strided_slice %6 {offsets = [0, 112], sizes = [4, 1000], strides = [1, 1]} : vector<4x1222xf32> to vector<4x1000xf32>
    %29 = vector.extract_strided_slice %6 {offsets = [0, 120], sizes = [4, 1000], strides = [1, 1]} : vector<4x1222xf32> to vector<4x1000xf32>
    %30 = vector.extract_strided_slice %6 {offsets = [0, 121], sizes = [4, 1000], strides = [1, 1]} : vector<4x1222xf32> to vector<4x1000xf32>
    %31 = vector.extract_strided_slice %6 {offsets = [0, 122], sizes = [4, 1000], strides = [1, 1]} : vector<4x1222xf32> to vector<4x1000xf32>
    %32 = tpu.concatenate %23, %24, %25, %26, %27, %28, %29, %30, %31 in 0 : vector<4x1000xf32>, vector<4x1000xf32>, vector<4x1000xf32>, vector<4x1000xf32>, vector<4x1000xf32>, vector<4x1000xf32>, vector<4x1000xf32>, vector<4x1000xf32>, vector<4x1000xf32> -> vector<36x1000xf32>
    %33 = arith.truncf %32 : vector<36x1000xf32> to vector<36x1000xbf16>
    %c0_11 = arith.constant 0 : index
    %c1 = arith.constant 1 : index
    %c0_12 = arith.constant 0 : index
    %c0_13 = arith.constant 0 : index
    %34 = vector.load %arg2[%c0_11, %c1, %c0_12, %c0_13] : memref<2x3x4x36xbf16, #tpu.memory_space<vmem>>, vector<1x1x4x36xbf16>
    %35 = vector.shape_cast %34 : vector<1x1x4x36xbf16> to vector<4x36xbf16>
    %cst_14 = arith.constant dense<0.000000e+00> : vector<4x1000xf32>
    %36 = tpu.matmul %35, %33, %cst_14 {dimension_numbers = #tpu.dot_dimension_numbers<[1], [0], [0], [1], [0, 0, 1, 1], [], []>} : vector<4x36xbf16>, vector<36x1000xbf16>, vector<4x1000xf32> -> vector<4x1000xf32>
    %37 = arith.addf %22, %36 : vector<4x1000xf32>
    %38 = vector.extract_strided_slice %6 {offsets = [0, 200], sizes = [4, 1000], strides = [1, 1]} : vector<4x1222xf32> to vector<4x1000xf32>
    %39 = vector.extract_strided_slice %6 {offsets = [0, 201], sizes = [4, 1000], strides = [1, 1]} : vector<4x1222xf32> to vector<4x1000xf32>
    %40 = vector.extract_strided_slice %6 {offsets = [0, 202], sizes = [4, 1000], strides = [1, 1]} : vector<4x1222xf32> to vector<4x1000xf32>
    %41 = vector.extract_strided_slice %6 {offsets = [0, 210], sizes = [4, 1000], strides = [1, 1]} : vector<4x1222xf32> to vector<4x1000xf32>
    %42 = vector.extract_strided_slice %6 {offsets = [0, 211], sizes = [4, 1000], strides = [1, 1]} : vector<4x1222xf32> to vector<4x1000xf32>
    %43 = vector.extract_strided_slice %6 {offsets = [0, 212], sizes = [4, 1000], strides = [1, 1]} : vector<4x1222xf32> to vector<4x1000xf32>
    %44 = vector.extract_strided_slice %6 {offsets = [0, 220], sizes = [4, 1000], strides = [1, 1]} : vector<4x1222xf32> to vector<4x1000xf32>
    %45 = vector.extract_strided_slice %6 {offsets = [0, 221], sizes = [4, 1000], strides = [1, 1]} : vector<4x1222xf32> to vector<4x1000xf32>
    %46 = vector.extract_strided_slice %6 {offsets = [0, 222], sizes = [4, 1000], strides = [1, 1]} : vector<4x1222xf32> to vector<4x1000xf32>
    %47 = tpu.concatenate %38, %39, %40, %41, %42, %43, %44, %45, %46 in 0 : vector<4x1000xf32>, vector<4x1000xf32>, vector<4x1000xf32>, vector<4x1000xf32>, vector<4x1000xf32>, vector<4x1000xf32>, vector<4x1000xf32>, vector<4x1000xf32>, vector<4x1000xf32> -> vector<36x1000xf32>
    %48 = arith.truncf %47 : vector<36x1000xf32> to vector<36x1000xbf16>
    %c0_15 = arith.constant 0 : index
    %c2 = arith.constant 2 : index
    %c0_16 = arith.constant 0 : index
    %c0_17 = arith.constant 0 : index
    %49 = vector.load %arg2[%c0_15, %c2, %c0_16, %c0_17] : memref<2x3x4x36xbf16, #tpu.memory_space<vmem>>, vector<1x1x4x36xbf16>
    %50 = vector.shape_cast %49 : vector<1x1x4x36xbf16> to vector<4x36xbf16>
    %cst_18 = arith.constant dense<0.000000e+00> : vector<4x1000xf32>
    %51 = tpu.matmul %50, %48, %cst_18 {dimension_numbers = #tpu.dot_dimension_numbers<[1], [0], [0], [1], [0, 0, 1, 1], [], []>} : vector<4x36xbf16>, vector<36x1000xbf16>, vector<4x1000xf32> -> vector<4x1000xf32>
    %52 = arith.addf %37, %51 : vector<4x1000xf32>
    %c0_19 = arith.constant 0 : index
    %c0_20 = arith.constant 0 : index
    %c0_21 = arith.constant 0 : index
    %53 = vector.load %arg3[%c0_19, %c0_20, %c0_21] : memref<2x4x1xf32, #tpu.memory_space<vmem>>, vector<1x4x1xf32>
    %54 = vector.shape_cast %53 : vector<1x4x1xf32> to vector<4x1xf32>
    %55 = vector.broadcast %54 : vector<4x1xf32> to vector<4x1000xf32>
    %56 = arith.addf %52, %55 : vector<4x1000xf32>
    %cst_22 = arith.constant 0.000000e+00 : f32
    %57 = vector.broadcast %cst_22 : f32 to vector<4x1000xf32>
    %58 = arith.maximumf %56, %57 : vector<4x1000xf32>
    %cst_23 = arith.constant 0.000000e+00 : f32
    %59 = vector.shape_cast %2 : vector<1x1000xi1> to vector<1x1000xi1>
    %60 = vector.broadcast %59 : vector<1x1000xi1> to vector<4x1000xi1>
    %61 = vector.broadcast %cst_23 : f32 to vector<4x1000xf32>
    %62 = arith.select %60, %58, %61 : vector<4x1000xi1>, vector<4x1000xf32>
    %63 = tpu.concatenate %3, %62, %3 in 1 : vector<4x111xf32>, vector<4x1000xf32>, vector<4x111xf32> -> vector<4x1222xf32>
    %cst_24 = arith.constant 0.000000e+00 : f32
    %64 = vector.broadcast %cst_24 : f32 to vector<4x1000xf32>
    %65 = vector.extract_strided_slice %63 {offsets = [0, 0], sizes = [4, 1000], strides = [1, 1]} : vector<4x1222xf32> to vector<4x1000xf32>
    %66 = vector.extract_strided_slice %63 {offsets = [0, 1], sizes = [4, 1000], strides = [1, 1]} : vector<4x1222xf32> to vector<4x1000xf32>
    %67 = vector.extract_strided_slice %63 {offsets = [0, 2], sizes = [4, 1000], strides = [1, 1]} : vector<4x1222xf32> to vector<4x1000xf32>
    %68 = vector.extract_strided_slice %63 {offsets = [0, 10], sizes = [4, 1000], strides = [1, 1]} : vector<4x1222xf32> to vector<4x1000xf32>
    %69 = vector.extract_strided_slice %63 {offsets = [0, 11], sizes = [4, 1000], strides = [1, 1]} : vector<4x1222xf32> to vector<4x1000xf32>
    %70 = vector.extract_strided_slice %63 {offsets = [0, 12], sizes = [4, 1000], strides = [1, 1]} : vector<4x1222xf32> to vector<4x1000xf32>
    %71 = vector.extract_strided_slice %63 {offsets = [0, 20], sizes = [4, 1000], strides = [1, 1]} : vector<4x1222xf32> to vector<4x1000xf32>
    %72 = vector.extract_strided_slice %63 {offsets = [0, 21], sizes = [4, 1000], strides = [1, 1]} : vector<4x1222xf32> to vector<4x1000xf32>
    %73 = vector.extract_strided_slice %63 {offsets = [0, 22], sizes = [4, 1000], strides = [1, 1]} : vector<4x1222xf32> to vector<4x1000xf32>
    %74 = tpu.concatenate %65, %66, %67, %68, %69, %70, %71, %72, %73 in 0 : vector<4x1000xf32>, vector<4x1000xf32>, vector<4x1000xf32>, vector<4x1000xf32>, vector<4x1000xf32>, vector<4x1000xf32>, vector<4x1000xf32>, vector<4x1000xf32>, vector<4x1000xf32> -> vector<36x1000xf32>
    %75 = arith.truncf %74 : vector<36x1000xf32> to vector<36x1000xbf16>
    %c1_25 = arith.constant 1 : index
    %c0_26 = arith.constant 0 : index
    %c0_27 = arith.constant 0 : index
    %c0_28 = arith.constant 0 : index
    %76 = vector.load %arg2[%c1_25, %c0_26, %c0_27, %c0_28] : memref<2x3x4x36xbf16, #tpu.memory_space<vmem>>, vector<1x1x4x36xbf16>
    %77 = vector.shape_cast %76 : vector<1x1x4x36xbf16> to vector<4x36xbf16>
    %cst_29 = arith.constant dense<0.000000e+00> : vector<4x1000xf32>
    %78 = tpu.matmul %77, %75, %cst_29 {dimension_numbers = #tpu.dot_dimension_numbers<[1], [0], [0], [1], [0, 0, 1, 1], [], []>} : vector<4x36xbf16>, vector<36x1000xbf16>, vector<4x1000xf32> -> vector<4x1000xf32>
    %79 = arith.addf %64, %78 : vector<4x1000xf32>
    %80 = vector.extract_strided_slice %63 {offsets = [0, 100], sizes = [4, 1000], strides = [1, 1]} : vector<4x1222xf32> to vector<4x1000xf32>
    %81 = vector.extract_strided_slice %63 {offsets = [0, 101], sizes = [4, 1000], strides = [1, 1]} : vector<4x1222xf32> to vector<4x1000xf32>
    %82 = vector.extract_strided_slice %63 {offsets = [0, 102], sizes = [4, 1000], strides = [1, 1]} : vector<4x1222xf32> to vector<4x1000xf32>
    %83 = vector.extract_strided_slice %63 {offsets = [0, 110], sizes = [4, 1000], strides = [1, 1]} : vector<4x1222xf32> to vector<4x1000xf32>
    %84 = vector.extract_strided_slice %63 {offsets = [0, 111], sizes = [4, 1000], strides = [1, 1]} : vector<4x1222xf32> to vector<4x1000xf32>
    %85 = vector.extract_strided_slice %63 {offsets = [0, 112], sizes = [4, 1000], strides = [1, 1]} : vector<4x1222xf32> to vector<4x1000xf32>
    %86 = vector.extract_strided_slice %63 {offsets = [0, 120], sizes = [4, 1000], strides = [1, 1]} : vector<4x1222xf32> to vector<4x1000xf32>
    %87 = vector.extract_strided_slice %63 {offsets = [0, 121], sizes = [4, 1000], strides = [1, 1]} : vector<4x1222xf32> to vector<4x1000xf32>
    %88 = vector.extract_strided_slice %63 {offsets = [0, 122], sizes = [4, 1000], strides = [1, 1]} : vector<4x1222xf32> to vector<4x1000xf32>
    %89 = tpu.concatenate %80, %81, %82, %83, %84, %85, %86, %87, %88 in 0 : vector<4x1000xf32>, vector<4x1000xf32>, vector<4x1000xf32>, vector<4x1000xf32>, vector<4x1000xf32>, vector<4x1000xf32>, vector<4x1000xf32>, vector<4x1000xf32>, vector<4x1000xf32> -> vector<36x1000xf32>
    %90 = arith.truncf %89 : vector<36x1000xf32> to vector<36x1000xbf16>
    %c1_30 = arith.constant 1 : index
    %c1_31 = arith.constant 1 : index
    %c0_32 = arith.constant 0 : index
    %c0_33 = arith.constant 0 : index
    %91 = vector.load %arg2[%c1_30, %c1_31, %c0_32, %c0_33] : memref<2x3x4x36xbf16, #tpu.memory_space<vmem>>, vector<1x1x4x36xbf16>
    %92 = vector.shape_cast %91 : vector<1x1x4x36xbf16> to vector<4x36xbf16>
    %cst_34 = arith.constant dense<0.000000e+00> : vector<4x1000xf32>
    %93 = tpu.matmul %92, %90, %cst_34 {dimension_numbers = #tpu.dot_dimension_numbers<[1], [0], [0], [1], [0, 0, 1, 1], [], []>} : vector<4x36xbf16>, vector<36x1000xbf16>, vector<4x1000xf32> -> vector<4x1000xf32>
    %94 = arith.addf %79, %93 : vector<4x1000xf32>
    %95 = vector.extract_strided_slice %63 {offsets = [0, 200], sizes = [4, 1000], strides = [1, 1]} : vector<4x1222xf32> to vector<4x1000xf32>
    %96 = vector.extract_strided_slice %63 {offsets = [0, 201], sizes = [4, 1000], strides = [1, 1]} : vector<4x1222xf32> to vector<4x1000xf32>
    %97 = vector.extract_strided_slice %63 {offsets = [0, 202], sizes = [4, 1000], strides = [1, 1]} : vector<4x1222xf32> to vector<4x1000xf32>
    %98 = vector.extract_strided_slice %63 {offsets = [0, 210], sizes = [4, 1000], strides = [1, 1]} : vector<4x1222xf32> to vector<4x1000xf32>
    %99 = vector.extract_strided_slice %63 {offsets = [0, 211], sizes = [4, 1000], strides = [1, 1]} : vector<4x1222xf32> to vector<4x1000xf32>
    %100 = vector.extract_strided_slice %63 {offsets = [0, 212], sizes = [4, 1000], strides = [1, 1]} : vector<4x1222xf32> to vector<4x1000xf32>
    %101 = vector.extract_strided_slice %63 {offsets = [0, 220], sizes = [4, 1000], strides = [1, 1]} : vector<4x1222xf32> to vector<4x1000xf32>
    %102 = vector.extract_strided_slice %63 {offsets = [0, 221], sizes = [4, 1000], strides = [1, 1]} : vector<4x1222xf32> to vector<4x1000xf32>
    %103 = vector.extract_strided_slice %63 {offsets = [0, 222], sizes = [4, 1000], strides = [1, 1]} : vector<4x1222xf32> to vector<4x1000xf32>
    %104 = tpu.concatenate %95, %96, %97, %98, %99, %100, %101, %102, %103 in 0 : vector<4x1000xf32>, vector<4x1000xf32>, vector<4x1000xf32>, vector<4x1000xf32>, vector<4x1000xf32>, vector<4x1000xf32>, vector<4x1000xf32>, vector<4x1000xf32>, vector<4x1000xf32> -> vector<36x1000xf32>
    %105 = arith.truncf %104 : vector<36x1000xf32> to vector<36x1000xbf16>
    %c1_35 = arith.constant 1 : index
    %c2_36 = arith.constant 2 : index
    %c0_37 = arith.constant 0 : index
    %c0_38 = arith.constant 0 : index
    %106 = vector.load %arg2[%c1_35, %c2_36, %c0_37, %c0_38] : memref<2x3x4x36xbf16, #tpu.memory_space<vmem>>, vector<1x1x4x36xbf16>
    %107 = vector.shape_cast %106 : vector<1x1x4x36xbf16> to vector<4x36xbf16>
    %cst_39 = arith.constant dense<0.000000e+00> : vector<4x1000xf32>
    %108 = tpu.matmul %107, %105, %cst_39 {dimension_numbers = #tpu.dot_dimension_numbers<[1], [0], [0], [1], [0, 0, 1, 1], [], []>} : vector<4x36xbf16>, vector<36x1000xbf16>, vector<4x1000xf32> -> vector<4x1000xf32>
    %109 = arith.addf %94, %108 : vector<4x1000xf32>
    %c1_40 = arith.constant 1 : index
    %c0_41 = arith.constant 0 : index
    %c0_42 = arith.constant 0 : index
    %110 = vector.load %arg3[%c1_40, %c0_41, %c0_42] : memref<2x4x1xf32, #tpu.memory_space<vmem>>, vector<1x4x1xf32>
    %111 = vector.shape_cast %110 : vector<1x4x1xf32> to vector<4x1xf32>
    %112 = vector.broadcast %111 : vector<4x1xf32> to vector<4x1000xf32>
    %113 = arith.addf %109, %112 : vector<4x1000xf32>
    %c0_43 = arith.constant 0 : index
    %c0_44 = arith.constant 0 : index
    %c0_45 = arith.constant 0 : index
    %114 = vector.load %arg1[%c0_43, %c0_44, %c0_45] : memref<1x4x1000xf32, #tpu.memory_space<vmem>>, vector<1x4x1000xf32>
    %115 = vector.shape_cast %114 : vector<1x4x1000xf32> to vector<4x1000xf32>
    %116 = arith.addf %113, %115 : vector<4x1000xf32>
    %cst_46 = arith.constant 0.000000e+00 : f32
    %117 = vector.broadcast %cst_46 : f32 to vector<4x1000xf32>
    %118 = arith.maximumf %116, %117 : vector<4x1000xf32>
    %cst_47 = arith.constant 0.000000e+00 : f32
    %119 = vector.shape_cast %2 : vector<1x1000xi1> to vector<1x1000xi1>
    %120 = vector.broadcast %119 : vector<1x1000xi1> to vector<4x1000xi1>
    %121 = vector.broadcast %cst_47 : f32 to vector<4x1000xf32>
    %122 = arith.select %120, %118, %121 : vector<4x1000xi1>, vector<4x1000xf32>
    %c0_48 = arith.constant 0 : index
    %c0_49 = arith.constant 0 : index
    %c0_50 = arith.constant 0 : index
    %123 = vector.load %arg5[%c0_48, %c0_49, %c0_50] : memref<1x4x1000xf32, #tpu.memory_space<vmem>>, vector<1x4x1000xf32>
    %124 = vector.shape_cast %123 : vector<1x4x1000xf32> to vector<4x1000xf32>
    %125 = vector.shape_cast %122 : vector<4x1000xf32> to vector<1x4x1000xf32>
    tpu.vector_store %arg5[%c0_48, %c0_49, %c0_50], %125 {strides = array<i32>} : memref<1x4x1000xf32, #tpu.memory_space<vmem>>, vector<1x4x1000xf32>,
    return
  }
  func.func @transform_0(%arg0: i32) -> (i32, i32, i32) {
    %c0_i32 = arith.constant 0 : i32
    %c0_i32_0 = arith.constant 0 : i32
    %c0_i32_1 = arith.constant 0 : i32
    return %arg0, %c0_i32, %c0_i32_0 : i32, i32, i32
  }
  func.func @transform_1(%arg0: i32) -> (i32, i32, i32, i32) {
    %c0_i32 = arith.constant 0 : i32
    %c0_i32_0 = arith.constant 0 : i32
    %c0_i32_1 = arith.constant 0 : i32
    %c0_i32_2 = arith.constant 0 : i32
    %c0_i32_3 = arith.constant 0 : i32
    return %c0_i32, %c0_i32_0, %c0_i32_1, %c0_i32_2 : i32, i32, i32, i32
  }
  func.func @transform_2(%arg0: i32) -> (i32, i32, i32) {
    %c0_i32 = arith.constant 0 : i32
    %c0_i32_0 = arith.constant 0 : i32
    %c0_i32_1 = arith.constant 0 : i32
    %c0_i32_2 = arith.constant 0 : i32
    return %c0_i32, %c0_i32_0, %c0_i32_1 : i32, i32, i32
  }
  func.func @transform_3(%arg0: i32) -> (i32, i32) {
    %c0_i32 = arith.constant 0 : i32
    %c0_i32_0 = arith.constant 0 : i32
    %c0_i32_1 = arith.constant 0 : i32
    return %c0_i32, %c0_i32_0 : i32, i32
  }
  func.func @transform_4(%arg0: i32) -> (i32, i32, i32) {
    %c0_i32 = arith.constant 0 : i32
    %c0_i32_0 = arith.constant 0 : i32
    %c0_i32_1 = arith.constant 0 : i32
    return %arg0, %c0_i32, %c0_i32_0 : i32, i32, i32
  }
}

</mosaic_0001>

<llo_original>
// kernel: residual_conv_block.1
$region0: #{residual_conv_block.1}
  #allocation0 [shape = 'u32[]', space=smem, size = 0x4, offset = 0x4, fixed_abs, tag = 'smem constant byte address 0x4 - core index']
  #allocation1 [shape = 'u32[144,128]{1,0:T(1,128)}', space=vmem, size = 0x12000, scoped, tag = 'internal scratch']
  %s0 = inlined_call_operand.vmem [shape: f32[2,4,1000], index: 0, kind: input, shape index: {}]
  %s1 = inlined_call_operand.vmem [shape: bf16[2,3,4,36], index: 1, kind: input, shape index: {}]
  %s2 = inlined_call_operand.vmem [shape: f32[2,4,1], index: 2, kind: input, shape index: {}]
  %s3 = inlined_call_operand.vmem [shape: f32[1,1000], index: 3, kind: input, shape index: {}]
  %s4 = inlined_call_operand.vmem [shape: f32[2,4,1000], index: 4, kind: output, shape index: {}]
  %s5 = sld [smem:[#allocation0]]
  $region49: #{residual_conv_block.1} parent=0
    _
  %s7 = ssub.s32 1, %s5
  %s8 = scalar_select 0, %s7, %s5
  loop: start=0, step=1, limit=4
  $region2: #{residual_conv_block.1} parent=0 // loop_pre_header
    _
  $region3: #{residual_conv_block.1} parent=0 // loop_header
    %s10 = sphi 0, %s14
    %p11 = scmp.ge.s32.totalorder %s10, 4
    %s20 = sphi 0, %s22
    %s23 = sphi 0, %s20
    %s24 = sphi 0, %s23
    %s40 = sphi 0, %s24
    %s44 = sphi 0, %s44
    %s46 = sphi 0, %s44
    %s47 = sphi 0, %s46
    %s61 = sphi 0, %s47
    %s65 = sphi 0, %s65
    %s67 = sphi 0, %s65
    %s68 = sphi 0, %s67
    %s82 = sphi 0, %s68
    %s86 = sphi 0, %s86
    %s88 = sphi 0, %s86
    %s89 = sphi 0, %s88
    %s103 = sphi 0, %s89
    %s109 = sphi 0, %s111
    %s112 = sphi 0, %s109
    %s113 = sphi 0, %s112
    %s129 = sphi 0, %s113
  $region4: #{residual_conv_block.1} parent=0 // loop_header_branch
    %13 = sbr.rel (%p11) target = $region8
  $region5: #{residual_conv_block.1} parent=0 // loop_body
    %s15 = ssub.s32 %s10, 1
    %s16 = ssub.s32 %s10, 2
    %s17 = sadd.s32 %s10, 1
    %s18 = ssub.s32 %s10, %s17
    %p19 = scmp.eq.s32.totalorder %s18, 0
    %s21 = sadd.s32 %s20, 1
    %s22 = scalar_select %p19, %s20, %s21
    %p25 = pneg %p19
    %p26 = scmp.eq.s32.totalorder %s10, 1
    %p27 = por %p25, %p26
    %p28 = scmp.ne.s32.totalorder %s20, %s23
    %p29 = scmp.eq.s32.totalorder %s10, 0
    %p30 = por %p28, %p29
    %p31 = scmp.ne.s32.totalorder %s20, %s23
    %p32 = scmp.eq.s32.totalorder %s15, 1
    %p33 = por %p31, %p32
    %p34 = scmp.ne.s32.totalorder %s23, %s24
    %p35 = scmp.eq.s32.totalorder %s15, 0
    %p36 = por %p34, %p35
    %p37 = scmp.ne.s32.totalorder %s23, %s24
    %p38 = scmp.eq.s32.totalorder %s16, 1
    %p39 = por %p37, %p38
    %p41 = scmp.ne.s32.totalorder %s24, %s40
    %p42 = scmp.eq.s32.totalorder %s16, 0
    %p43 = por %p41, %p42
    %s45 = sadd.s32 %s44, 1
    %p48 = scmp.eq.s32.totalorder %s10, 1
    %p49 = scmp.ne.s32.totalorder %s44, %s46
    %p50 = scmp.eq.s32.totalorder %s10, 0
    %p51 = por %p49, %p50
    %p52 = scmp.ne.s32.totalorder %s44, %s46
    %p53 = scmp.eq.s32.totalorder %s15, 1
    %p54 = por %p52, %p53
    %p55 = scmp.ne.s32.totalorder %s46, %s47
    %p56 = scmp.eq.s32.totalorder %s15, 0
    %p57 = por %p55, %p56
    %p58 = scmp.ne.s32.totalorder %s46, %s47
    %p59 = scmp.eq.s32.totalorder %s16, 1
    %p60 = por %p58, %p59
    %p62 = scmp.ne.s32.totalorder %s47, %s61
    %p63 = scmp.eq.s32.totalorder %s16, 0
    %p64 = por %p62, %p63
    %s66 = sadd.s32 %s65, 1
    %p69 = scmp.eq.s32.totalorder %s10, 1
    %p70 = scmp.ne.s32.totalorder %s65, %s67
    %p71 = scmp.eq.s32.totalorder %s10, 0
    %p72 = por %p70, %p71
    %p73 = scmp.ne.s32.totalorder %s65, %s67
    %p74 = scmp.eq.s32.totalorder %s15, 1
    %p75 = por %p73, %p74
    %p76 = scmp.ne.s32.totalorder %s67, %s68
    %p77 = scmp.eq.s32.totalorder %s15, 0
    %p78 = por %p76, %p77
    %p79 = scmp.ne.s32.totalorder %s67, %s68
    %p80 = scmp.eq.s32.totalorder %s16, 1
    %p81 = por %p79, %p80
    %p83 = scmp.ne.s32.totalorder %s68, %s82
    %p84 = scmp.eq.s32.totalorder %s16, 0
    %p85 = por %p83, %p84
    %s87 = sadd.s32 %s86, 1
    %p90 = scmp.eq.s32.totalorder %s10, 1
    %p91 = scmp.ne.s32.totalorder %s86, %s88
    %p92 = scmp.eq.s32.totalorder %s10, 0
    %p93 = por %p91, %p92
    %p94 = scmp.ne.s32.totalorder %s86, %s88
    %p95 = scmp.eq.s32.totalorder %s15, 1
    %p96 = por %p94, %p95
    %p97 = scmp.ne.s32.totalorder %s88, %s89
    %p98 = scmp.eq.s32.totalorder %s15, 0
    %p99 = por %p97, %p98
    %p100 = scmp.ne.s32.totalorder %s88, %s89
    %p101 = scmp.eq.s32.totalorder %s16, 1
    %p102 = por %p100, %p101
    %p104 = scmp.ne.s32.totalorder %s89, %s103
    %p105 = scmp.eq.s32.totalorder %s16, 0
    %p106 = por %p104, %p105
    %s107 = ssub.s32 %s10, %s17
    %p108 = scmp.eq.s32.totalorder %s107, 0
    %s110 = sadd.s32 %s109, 1
    %s111 = scalar_select %p108, %s109, %s110
    %p114 = pneg %p108
    %p115 = scmp.eq.s32.totalorder %s10, 1
    %p116 = por %p114, %p115
    %p117 = scmp.ne.s32.totalorder %s109, %s112
    %p118 = scmp.eq.s32.totalorder %s10, 0
    %p119 = por %p117, %p118
    %p120 = scmp.ne.s32.totalorder %s109, %s112
    %p121 = scmp.eq.s32.totalorder %s15, 1
    %p122 = por %p120, %p121
    %p123 = scmp.ne.s32.totalorder %s112, %s113
    %p124 = scmp.eq.s32.totalorder %s15, 0
    %p125 = por %p123, %p124
    %p126 = scmp.ne.s32.totalorder %s112, %s113
    %p127 = scmp.eq.s32.totalorder %s16, 1
    %p128 = por %p126, %p127
    %p130 = scmp.ne.s32.totalorder %s113, %s129
    %p131 = scmp.eq.s32.totalorder %s16, 0
    %p132 = por %p130, %p131
    %p133 = scmp.le.s32.totalorder 1, %s10
    %p134 = scmp.lt.s32.totalorder %s10, 3
    %p135 = pnand %p133, %p134
    %p136 = pneg %p135
    // Predicated region
    $region9: #{residual_conv_block.1} parent=5 // pred_check
      _
    $region10: #{residual_conv_block.1} parent=5 // pred_check_branch
      %138 = sbr.rel (%p135) target = $region12
    $region11: #{residual_conv_block.1} parent=5 // pred_region
      %s139 = ssub.s32 %s10, 1
      // Predicated region
      $region13: #{residual_conv_block.1} parent=11 // pred_check
        %p140 = pneg %p57
      $region14: #{residual_conv_block.1} parent=11 // pred_check_branch
        %142 = sbr.rel (%p140) target = $region16
      $region15: #{residual_conv_block.1} parent=11 // pred_region
        _
      $region16: #{residual_conv_block.1} parent=11 // pred_fallthru
        _
      // Predicated region
      $region17: #{residual_conv_block.1} parent=11 // pred_check
        %p143 = pneg %p78
      $region18: #{residual_conv_block.1} parent=11 // pred_check_branch
        %145 = sbr.rel (%p143) target = $region20
      $region19: #{residual_conv_block.1} parent=11 // pred_region
        _
      $region20: #{residual_conv_block.1} parent=11 // pred_fallthru
        _
      // Predicated region
      $region21: #{residual_conv_block.1} parent=11 // pred_check
        %p146 = pneg %p99
      $region22: #{residual_conv_block.1} parent=11 // pred_check_branch
        %148 = sbr.rel (%p146) target = $region24
      $region23: #{residual_conv_block.1} parent=11 // pred_region
        _
      $region24: #{residual_conv_block.1} parent=11 // pred_fallthru
        _
    $region12: #{residual_conv_block.1} parent=5 // pred_fallthru
      _
    %p149 = scmp.lt.s32.totalorder %s10, 2
    // Predicated region
    $region25: #{residual_conv_block.1} parent=5 // pred_check
      %p150 = pneg %p149
    $region26: #{residual_conv_block.1} parent=5 // pred_check_branch
      %152 = sbr.rel (%p150) target = $region28
    $region27: #{residual_conv_block.1} parent=5 // pred_region
      // Predicated region
      $region29: #{residual_conv_block.1} parent=27 // pred_check
        %p153 = pneg %p30
      $region30: #{residual_conv_block.1} parent=27 // pred_check_branch
        %155 = sbr.rel (%p153) target = $region32
      $region31: #{residual_conv_block.1} parent=27 // pred_region
        %p156 = scmp.lt.s32.totalorder %s10, 1
        %s157 = scalar_select %p156, %s10, 1
        %s158 = smul.addr %s157, 8
        %s159 = smul.addr %s158, 4
        %s160 = scalar_lea.vmem %s0, %s159
      $region32: #{residual_conv_block.1} parent=27 // pred_fallthru
        _
    $region28: #{residual_conv_block.1} parent=5 // pred_fallthru
      _
    %p161 = scmp.le.s32.totalorder 1, %s10
    %p162 = scmp.lt.s32.totalorder %s10, 3
    %p163 = pnand %p161, %p162
    %p164 = pneg %p163
    // Predicated region
    $region33: #{residual_conv_block.1} parent=5 // pred_check
      _
    $region34: #{residual_conv_block.1} parent=5 // pred_check_branch
      %166 = sbr.rel (%p163) target = $region36
    $region35: #{residual_conv_block.1} parent=5 // pred_region
      %s167 = ssub.s32 %s10, 1
      %p168 = scmp.lt.s32.totalorder %s15, 1
      %s169 = scalar_select %p168, %s15, 1
      %s170 = smul.addr %s169, 8
      %s171 = smul.addr %s170, 4
      %s172 = scalar_lea.vmem %s0, %s171
      %p173 = pneg %p36
      %p174 = pneg %p33
      %p175 = pneg %p57
      %p176 = pneg %p54
      %p177 = pneg %p78
      %p178 = pneg %p75
      %p179 = pneg %p99
      %p180 = pneg %p96
      %p181 = pneg %p125
      %p182 = pneg %p122
      %p183 = scmp.lt.s32.totalorder %s15, 1
      %s184 = scalar_select %p183, %s15, 1
      %s185 = smul.addr %s184, 8
      %s186 = smul.addr %s185, 4
      %s187 = scalar_lea.vmem %s4, %s186
      %p188 = scmp.lt.s32.totalorder %s15, 1
      %s189 = scalar_select %p188, %s15, 1
      %s190 = smul.addr %s189, 8
      %s191 = smul.addr %s190, 4
      %s192 = scalar_lea.vmem %s0, %s191
      %p193 = scmp.lt.s32.totalorder %s15, 1
      %s194 = scalar_select %p193, %s15, 1
      %s195 = smul.addr %s194, 8
      %s196 = smul.addr %s195, 4
      %s197 = scalar_lea.vmem %s4, %s196
      %v199 = vld [vmem:[%s3] sm:$0xff]
      %vm200 = vcmp.gt.f32.partialorder %v199, 0.5
      %v201 = vld [vmem:[%s192] sm:$0xff]
      %v202 = vld [vmem:[%s192 + $0x8] sm:$0xff]
      %v203 = vld [vmem:[%s192 + $0x10] sm:$0xff]
      %v204 = vld [vmem:[%s192 + $0x18] sm:$0xff]
      %v209 = vcombine.high %v201, %v201
      %v210 = vcombine.high %v202, %v202
      %v211 = vcombine.high %v203, %v203
      %v212 = vcombine.high %v204, %v204
      %213 = vrot.lane.b32.xlu0 %v201, 111
      %v214 = vpop.permute.xlu0 %213
      %215 = vrot.lane.b32.xlu0 %v209, 111
      %v216 = vpop.permute.xlu0 %215
      %217 = vrot.lane.b32.xlu0 %v202, 111
      %v218 = vpop.permute.xlu0 %217
      %219 = vrot.lane.b32.xlu0 %v210, 111
      %v220 = vpop.permute.xlu0 %219
      %221 = vrot.lane.b32.xlu0 %v203, 111
      %v222 = vpop.permute.xlu0 %221
      %223 = vrot.lane.b32.xlu0 %v211, 111
      %v224 = vpop.permute.xlu0 %223
      %225 = vrot.lane.b32.xlu0 %v204, 111
      %v226 = vpop.permute.xlu0 %225
      %227 = vrot.lane.b32.xlu0 %v212, 111
      %v228 = vpop.permute.xlu0 %227
      %vm229 = vcmask 908288
      %v230 = vsel %vm229, %v214, %v216
      %v231 = vsel %vm229, %v216, %v218
      %v232 = vsel %vm229, %v218, %v220
      %v233 = vsel %vm229, %v220, %v222
      %v234 = vsel %vm229, %v222, %v224
      %v235 = vsel %vm229, %v224, %v226
      %v236 = vsel %vm229, %v226, %v228
      %v246 = vsel %vm229, 0.0, %v214
      %vm247 = vcmask 711680
      %v248 = vsel %vm247, %v228, 0.0
      %v250 = vrot.slane %v246, 4
      %v251 = vrot.slane %v230, 4
      %v252 = vrot.slane %v231, 4
      %v253 = vrot.slane %v232, 4
      %v254 = vrot.slane %v233, 4
      %v255 = vrot.slane %v234, 4
      %v256 = vrot.slane %v235, 4
      %v257 = vrot.slane %v236, 4
      %258 = vrot.lane.b32.xlu0 %v250, 127
      %v259 = vpop.permute.xlu0 %258
      %260 = vrot.lane.b32.xlu0 %v251, 127
      %v261 = vpop.permute.xlu0 %260
      %262 = vrot.lane.b32.xlu0 %v252, 127
      %v263 = vpop.permute.xlu0 %262
      %264 = vrot.lane.b32.xlu0 %v253, 127
      %v265 = vpop.permute.xlu0 %264
      %266 = vrot.lane.b32.xlu0 %v254, 127
      %v267 = vpop.permute.xlu0 %266
      %268 = vrot.lane.b32.xlu0 %v255, 127
      %v269 = vpop.permute.xlu0 %268
      %270 = vrot.lane.b32.xlu0 %v256, 127
      %v271 = vpop.permute.xlu0 %270
      %272 = vrot.lane.b32.xlu0 %v257, 127
      %v273 = vpop.permute.xlu0 %272
      %vm274 = vcmask 1039360
      %v275 = vsel %vm274, %v259, %v261
      %v276 = vsel %vm274, %v261, %v263
      %v277 = vsel %vm274, %v263, %v265
      %v278 = vsel %vm274, %v265, %v267
      %v279 = vsel %vm274, %v267, %v269
      %v280 = vsel %vm274, %v269, %v271
      %v281 = vsel %vm274, %v271, %v273
      %290 = vrot.lane.b32.xlu0 %v246, 126
      %v291 = vpop.permute.xlu0 %290
      %292 = vrot.lane.b32.xlu0 %v230, 126
      %v293 = vpop.permute.xlu0 %292
      %294 = vrot.lane.b32.xlu0 %v231, 126
      %v295 = vpop.permute.xlu0 %294
      %296 = vrot.lane.b32.xlu0 %v232, 126
      %v297 = vpop.permute.xlu0 %296
      %298 = vrot.lane.b32.xlu0 %v233, 126
      %v299 = vpop.permute.xlu0 %298
      %300 = vrot.lane.b32.xlu0 %v234, 126
      %v301 = vpop.permute.xlu0 %300
      %302 = vrot.lane.b32.xlu0 %v235, 126
      %v303 = vpop.permute.xlu0 %302
      %304 = vrot.lane.b32.xlu0 %v236, 126
      %v305 = vpop.permute.xlu0 %304
      %vm306 = vcmask 1031168
      %v307 = vsel %vm306, %v291, %v293
      %v308 = vsel %vm306, %v293, %v295
      %v309 = vsel %vm306, %v295, %v297
      %v310 = vsel %vm306, %v297, %v299
      %v311 = vsel %vm306, %v299, %v301
      %v312 = vsel %vm306, %v301, %v303
      %v313 = vsel %vm306, %v303, %v305
      %322 = vrot.lane.b32.xlu0 %v250, 118
      %v323 = vpop.permute.xlu0 %322
      %324 = vrot.lane.b32.xlu0 %v251, 118
      %v325 = vpop.permute.xlu0 %324
      %326 = vrot.lane.b32.xlu0 %v252, 118
      %v327 = vpop.permute.xlu0 %326
      %328 = vrot.lane.b32.xlu0 %v253, 118
      %v329 = vpop.permute.xlu0 %328
      %330 = vrot.lane.b32.xlu0 %v254, 118
      %v331 = vpop.permute.xlu0 %330
      %332 = vrot.lane.b32.xlu0 %v255, 118
      %v333 = vpop.permute.xlu0 %332
      %334 = vrot.lane.b32.xlu0 %v256, 118
      %v335 = vpop.permute.xlu0 %334
      %336 = vrot.lane.b32.xlu0 %v257, 118
      %v337 = vpop.permute.xlu0 %336
      %vm338 = vcmask 965632
      %v339 = vsel %vm338, %v323, %v325
      %v340 = vsel %vm338, %v325, %v327
      %v341 = vsel %vm338, %v327, %v329
      %v342 = vsel %vm338, %v329, %v331
      %v343 = vsel %vm338, %v331, %v333
      %v344 = vsel %vm338, %v333, %v335
      %v345 = vsel %vm338, %v335, %v337
      %354 = vrot.lane.b32.xlu0 %v246, 117
      %v355 = vpop.permute.xlu0 %354
      %356 = vrot.lane.b32.xlu0 %v230, 117
      %v357 = vpop.permute.xlu0 %356
      %358 = vrot.lane.b32.xlu0 %v231, 117
      %v359 = vpop.permute.xlu0 %358
      %360 = vrot.lane.b32.xlu0 %v232, 117
      %v361 = vpop.permute.xlu0 %360
      %362 = vrot.lane.b32.xlu0 %v233, 117
      %v363 = vpop.permute.xlu0 %362
      %364 = vrot.lane.b32.xlu0 %v234, 117
      %v365 = vpop.permute.xlu0 %364
      %366 = vrot.lane.b32.xlu0 %v235, 117
      %v367 = vpop.permute.xlu0 %366
      %368 = vrot.lane.b32.xlu0 %v236, 117
      %v369 = vpop.permute.xlu0 %368
      %vm370 = vcmask 957440
      %v371 = vsel %vm370, %v355, %v357
      %v372 = vsel %vm370, %v357, %v359
      %v373 = vsel %vm370, %v359, %v361
      %v374 = vsel %vm370, %v361, %v363
      %v375 = vsel %vm370, %v363, %v365
      %v376 = vsel %vm370, %v365, %v367
      %v377 = vsel %vm370, %v367, %v369
      %386 = vrot.lane.b32.xlu0 %v250, 116
      %v387 = vpop.permute.xlu0 %386
      %388 = vrot.lane.b32.xlu0 %v251, 116
      %v389 = vpop.permute.xlu0 %388
      %390 = vrot.lane.b32.xlu0 %v252, 116
      %v391 = vpop.permute.xlu0 %390
      %392 = vrot.lane.b32.xlu0 %v253, 116
      %v393 = vpop.permute.xlu0 %392
      %394 = vrot.lane.b32.xlu0 %v254, 116
      %v395 = vpop.permute.xlu0 %394
      %396 = vrot.lane.b32.xlu0 %v255, 116
      %v397 = vpop.permute.xlu0 %396
      %398 = vrot.lane.b32.xlu0 %v256, 116
      %v399 = vpop.permute.xlu0 %398
      %400 = vrot.lane.b32.xlu0 %v257, 116
      %v401 = vpop.permute.xlu0 %400
      %vm402 = vcmask 949248
      %v403 = vsel %vm402, %v387, %v389
      %v404 = vsel %vm402, %v389, %v391
      %v405 = vsel %vm402, %v391, %v393
      %v406 = vsel %vm402, %v393, %v395
      %v407 = vsel %vm402, %v395, %v397
      %v408 = vsel %vm402, %v397, %v399
      %v409 = vsel %vm402, %v399, %v401
      %418 = vrot.lane.b32.xlu0 %v246, 108
      %v419 = vpop.permute.xlu0 %418
      %420 = vrot.lane.b32.xlu0 %v230, 108
      %v421 = vpop.permute.xlu0 %420
      %422 = vrot.lane.b32.xlu0 %v231, 108
      %v423 = vpop.permute.xlu0 %422
      %424 = vrot.lane.b32.xlu0 %v232, 108
      %v425 = vpop.permute.xlu0 %424
      %426 = vrot.lane.b32.xlu0 %v233, 108
      %v427 = vpop.permute.xlu0 %426
      %428 = vrot.lane.b32.xlu0 %v234, 108
      %v429 = vpop.permute.xlu0 %428
      %430 = vrot.lane.b32.xlu0 %v235, 108
      %v431 = vpop.permute.xlu0 %430
      %432 = vrot.lane.b32.xlu0 %v236, 108
      %v433 = vpop.permute.xlu0 %432
      %vm434 = vcmask 883712
      %v435 = vsel %vm434, %v419, %v421
      %v436 = vsel %vm434, %v421, %v423
      %v437 = vsel %vm434, %v423, %v425
      %v438 = vsel %vm434, %v425, %v427
      %v439 = vsel %vm434, %v427, %v429
      %v440 = vsel %vm434, %v429, %v431
      %v441 = vsel %vm434, %v431, %v433
      %450 = vrot.lane.b32.xlu0 %v250, 107
      %v451 = vpop.permute.xlu0 %450
      %452 = vrot.lane.b32.xlu0 %v251, 107
      %v453 = vpop.permute.xlu0 %452
      %454 = vrot.lane.b32.xlu0 %v252, 107
      %v455 = vpop.permute.xlu0 %454
      %456 = vrot.lane.b32.xlu0 %v253, 107
      %v457 = vpop.permute.xlu0 %456
      %458 = vrot.lane.b32.xlu0 %v254, 107
      %v459 = vpop.permute.xlu0 %458
      %460 = vrot.lane.b32.xlu0 %v255, 107
      %v461 = vpop.permute.xlu0 %460
      %462 = vrot.lane.b32.xlu0 %v256, 107
      %v463 = vpop.permute.xlu0 %462
      %464 = vrot.lane.b32.xlu0 %v257, 107
      %v465 = vpop.permute.xlu0 %464
      %vm466 = vcmask 875520
      %v467 = vsel %vm466, %v451, %v453
      %v468 = vsel %vm466, %v453, %v455
      %v469 = vsel %vm466, %v455, %v457
      %v470 = vsel %vm466, %v457, %v459
      %v471 = vsel %vm466, %v459, %v461
      %v472 = vsel %vm466, %v461, %v463
      %v473 = vsel %vm466, %v463, %v465
      %482 = vrot.lane.b32.xlu0 %v246, 106
      %v483 = vpop.permute.xlu0 %482
      %484 = vrot.lane.b32.xlu0 %v230, 106
      %v485 = vpop.permute.xlu0 %484
      %486 = vrot.lane.b32.xlu0 %v231, 106
      %v487 = vpop.permute.xlu0 %486
      %488 = vrot.lane.b32.xlu0 %v232, 106
      %v489 = vpop.permute.xlu0 %488
      %490 = vrot.lane.b32.xlu0 %v233, 106
      %v491 = vpop.permute.xlu0 %490
      %492 = vrot.lane.b32.xlu0 %v234, 106
      %v493 = vpop.permute.xlu0 %492
      %494 = vrot.lane.b32.xlu0 %v235, 106
      %v495 = vpop.permute.xlu0 %494
      %496 = vrot.lane.b32.xlu0 %v236, 106
      %v497 = vpop.permute.xlu0 %496
      %vm498 = vcmask 867328
      %v499 = vsel %vm498, %v483, %v485
      %v500 = vsel %vm498, %v485, %v487
      %v501 = vsel %vm498, %v487, %v489
      %v502 = vsel %vm498, %v489, %v491
      %v503 = vsel %vm498, %v491, %v493
      %v504 = vsel %vm498, %v493, %v495
      %v505 = vsel %vm498, %v495, %v497
      %vm514 = vcmask 1043456
      %v515 = vsel %vm514, %v246, %v275
      %v516 = vsel %vm514, %v230, %v276
      %v517 = vsel %vm514, %v231, %v277
      %v518 = vsel %vm514, %v232, %v278
      %v519 = vsel %vm514, %v233, %v279
      %v520 = vsel %vm514, %v234, %v280
      %v521 = vsel %vm514, %v235, %v281
      %v522 = vsel %vm514, %v236, %v273
      %v523 = vsel %vm514, %v307, %v339
      %v524 = vsel %vm514, %v308, %v340
      %v525 = vsel %vm514, %v309, %v341
      %v526 = vsel %vm514, %v310, %v342
      %v527 = vsel %vm514, %v311, %v343
      %v528 = vsel %vm514, %v312, %v344
      %v529 = vsel %vm514, %v313, %v345
      %v530 = vsel %vm514, %v305, %v337
      %v531 = vsel %vm514, %v371, %v403
      %v532 = vsel %vm514, %v372, %v404
      %v533 = vsel %vm514, %v373, %v405
      %v534 = vsel %vm514, %v374, %v406
      %v535 = vsel %vm514, %v375, %v407
      %v536 = vsel %vm514, %v376, %v408
      %v537 = vsel %vm514, %v377, %v409
      %v538 = vsel %vm514, %v369, %v401
      %v539 = vsel %vm514, %v435, %v467
      %v540 = vsel %vm514, %v436, %v468
      %v541 = vsel %vm514, %v437, %v469
      %v542 = vsel %vm514, %v438, %v470
      %v543 = vsel %vm514, %v439, %v471
      %v544 = vsel %vm514, %v440, %v472
      %v545 = vsel %vm514, %v441, %v473
      %v546 = vsel %vm514, %v433, %v465
      %v547 = vpack.c.bf16 %v523, %v515
      %v548 = vpack.c.bf16 %v524, %v516
      %v549 = vpack.c.bf16 %v525, %v517
      %v550 = vpack.c.bf16 %v526, %v518
      %v551 = vpack.c.bf16 %v527, %v519
      %v552 = vpack.c.bf16 %v528, %v520
      %v553 = vpack.c.bf16 %v529, %v521
      %v554 = vpack.c.bf16 %v530, %v522
      %v555 = vpack.c.bf16 %v539, %v531
      %v556 = vpack.c.bf16 %v540, %v532
      %v557 = vpack.c.bf16 %v541, %v533
      %v558 = vpack.c.bf16 %v542, %v534
      %v559 = vpack.c.bf16 %v543, %v535
      %v560 = vpack.c.bf16 %v544, %v536
      %v561 = vpack.c.bf16 %v545, %v537
      %v562 = vpack.c.bf16 %v546, %v538
      %v563 = vpack.c.bf16 %v499, %v499
      %v564 = vpack.c.bf16 %v500, %v500
      %v565 = vpack.c.bf16 %v501, %v501
      %v566 = vpack.c.bf16 %v502, %v502
      %v567 = vpack.c.bf16 %v503, %v503
      %v568 = vpack.c.bf16 %v504, %v504
      %v569 = vpack.c.bf16 %v505, %v505
      %v570 = vpack.c.bf16 %v497, %v497
      %v571 = vld [vmem:[%s1] sm:$0x3]
      %v573 = vrot.slane %v248, 4
      %574 = vrot.lane.b32.xlu0 %v573, 127
      %v575 = vpop.permute.xlu0 %574
      %v576 = vsel %vm274, %v273, %v575
      %579 = vrot.lane.b32.xlu0 %v248, 126
      %v580 = vpop.permute.xlu0 %579
      %v581 = vsel %vm306, %v305, %v580
      %584 = vrot.lane.b32.xlu0 %v573, 118
      %v585 = vpop.permute.xlu0 %584
      %v586 = vsel %vm338, %v337, %v585
      %589 = vrot.lane.b32.xlu0 %v248, 117
      %v590 = vpop.permute.xlu0 %589
      %v591 = vsel %vm370, %v369, %v590
      %594 = vrot.lane.b32.xlu0 %v573, 116
      %v595 = vpop.permute.xlu0 %594
      %v596 = vsel %vm402, %v401, %v595
      %599 = vrot.lane.b32.xlu0 %v248, 108
      %v600 = vpop.permute.xlu0 %599
      %v601 = vsel %vm434, %v433, %v600
      %604 = vrot.lane.b32.xlu0 %v573, 107
      %v605 = vpop.permute.xlu0 %604
      %v606 = vsel %vm466, %v465, %v605
      %609 = vrot.lane.b32.xlu0 %v248, 106
      %v610 = vpop.permute.xlu0 %609
      %v611 = vsel %vm498, %v497, %v610
      %v614 = vsel %vm514, %v236, %v576
      %v615 = vsel %vm514, %v248, %v575
      %v616 = vsel %vm514, %v581, %v586
      %v617 = vsel %vm514, %v580, %v585
      %v618 = vsel %vm514, %v591, %v596
      %v619 = vsel %vm514, %v590, %v595
      %v620 = vsel %vm514, %v601, %v606
      %v621 = vsel %vm514, %v600, %v605
      %v622 = vpack.c.bf16 %v616, %v614
      %v623 = vpack.c.bf16 %v617, %v615
      %v624 = vpack.c.bf16 %v620, %v618
      %v625 = vpack.c.bf16 %v621, %v619
      %v626 = vpack.c.bf16 %v611, %v611
      %v627 = vpack.c.bf16 %v610, %v610
      %s628 = scalar_lea.vmem %s1, 2
      %v629 = vld [vmem:[%s628] sm:$0x3]
      %657 = vrot.lane.b32.xlu0 %v547, 28
      %v658 = vpop.permute.xlu0 %657
      %659 = vrot.lane.b32.xlu0 %v548, 28
      %v660 = vpop.permute.xlu0 %659
      %661 = vrot.lane.b32.xlu0 %v549, 28
      %v662 = vpop.permute.xlu0 %661
      %663 = vrot.lane.b32.xlu0 %v550, 28
      %v664 = vpop.permute.xlu0 %663
      %665 = vrot.lane.b32.xlu0 %v551, 28
      %v666 = vpop.permute.xlu0 %665
      %667 = vrot.lane.b32.xlu0 %v552, 28
      %v668 = vpop.permute.xlu0 %667
      %669 = vrot.lane.b32.xlu0 %v553, 28
      %v670 = vpop.permute.xlu0 %669
      %671 = vrot.lane.b32.xlu0 %v622, 28
      %v672 = vpop.permute.xlu0 %671
      %673 = vrot.lane.b32.xlu0 %v623, 28
      %v674 = vpop.permute.xlu0 %673
      %675 = vrot.lane.b32.xlu0 %v555, 28
      %v676 = vpop.permute.xlu0 %675
      %677 = vrot.lane.b32.xlu0 %v556, 28
      %v678 = vpop.permute.xlu0 %677
      %679 = vrot.lane.b32.xlu0 %v557, 28
      %v680 = vpop.permute.xlu0 %679
      %681 = vrot.lane.b32.xlu0 %v558, 28
      %v682 = vpop.permute.xlu0 %681
      %683 = vrot.lane.b32.xlu0 %v559, 28
      %v684 = vpop.permute.xlu0 %683
      %685 = vrot.lane.b32.xlu0 %v560, 28
      %v686 = vpop.permute.xlu0 %685
      %687 = vrot.lane.b32.xlu0 %v561, 28
      %v688 = vpop.permute.xlu0 %687
      %689 = vrot.lane.b32.xlu0 %v624, 28
      %v690 = vpop.permute.xlu0 %689
      %691 = vrot.lane.b32.xlu0 %v625, 28
      %v692 = vpop.permute.xlu0 %691
      %693 = vrot.lane.b32.xlu0 %v563, 28
      %v694 = vpop.permute.xlu0 %693
      %695 = vrot.lane.b32.xlu0 %v564, 28
      %v696 = vpop.permute.xlu0 %695
      %697 = vrot.lane.b32.xlu0 %v565, 28
      %v698 = vpop.permute.xlu0 %697
      %699 = vrot.lane.b32.xlu0 %v566, 28
      %v700 = vpop.permute.xlu0 %699
      %701 = vrot.lane.b32.xlu0 %v567, 28
      %v702 = vpop.permute.xlu0 %701
      %703 = vrot.lane.b32.xlu0 %v568, 28
      %v704 = vpop.permute.xlu0 %703
      %705 = vrot.lane.b32.xlu0 %v569, 28
      %v706 = vpop.permute.xlu0 %705
      %707 = vrot.lane.b32.xlu0 %v626, 28
      %v708 = vpop.permute.xlu0 %707
      %709 = vrot.lane.b32.xlu0 %v627, 28
      %v710 = vpop.permute.xlu0 %709
      %vm711 = vcmask 228352
      %v712 = vsel %vm711, %v658, %v660
      %v713 = vsel %vm711, %v660, %v662
      %v714 = vsel %vm711, %v662, %v664
      %v715 = vsel %vm711, %v664, %v666
      %v716 = vsel %vm711, %v666, %v668
      %v717 = vsel %vm711, %v668, %v670
      %v718 = vsel %vm711, %v670, %v672
      %v719 = vsel %vm711, %v672, %v674
      %v720 = vsel %vm711, %v676, %v678
      %v721 = vsel %vm711, %v678, %v680
      %v722 = vsel %vm711, %v680, %v682
      %v723 = vsel %vm711, %v682, %v684
      %v724 = vsel %vm711, %v684, %v686
      %v725 = vsel %vm711, %v686, %v688
      %v726 = vsel %vm711, %v688, %v690
      %v727 = vsel %vm711, %v690, %v692
      %v728 = vsel %vm711, %v694, %v696
      %v729 = vsel %vm711, %v696, %v698
      %v730 = vsel %vm711, %v698, %v700
      %v731 = vsel %vm711, %v700, %v702
      %v732 = vsel %vm711, %v702, %v704
      %v733 = vsel %vm711, %v704, %v706
      %v734 = vsel %vm711, %v706, %v708
      %v735 = vsel %vm711, %v708, %v710
      %vm752 = vcmask 293888
      %v754 = vsel %vm752, %v629, 0
      %vm756 = vcmask 1041408
      %v758 = vsel %vm756, %v728, 0
      %v761 = vsel %vm756, %v729, 0
      %v764 = vsel %vm756, %v730, 0
      %v767 = vsel %vm756, %v731, 0
      %v770 = vsel %vm756, %v732, 0
      %v773 = vsel %vm756, %v733, 0
      %v776 = vsel %vm756, %v734, 0
      %v779 = vsel %vm756, %v735, 0
      %781 = vmatprep.subr.bf16.mxu0 0
      %782 = vmatpush1.bf16.msra.mxu0 0
      %783 = vmatprep.subr.bf16.mxu0 0
      %784 = vmatpush1.bf16.msra.mxu0 0
      %785 = vmatprep.subr.bf16.mxu0 0
      %786 = vmatpush1.bf16.msra.mxu0 0
      %787 = vmatprep.subr.bf16.mxu0 0
      %788 = vmatpush1.bf16.msra.mxu0 0
      %789 = vmatprep.subr.bf16.mxu0 0
      %790 = vmatpush1.bf16.msra.mxu0 0
      %791 = vmatprep.subr.bf16.mxu0 %v761
      %792 = vmatpush1.bf16.msra.mxu0 %v758
      %793 = vmatprep.subr.bf16.mxu0 %v721
      %794 = vmatpush1.bf16.msra.mxu0 %v720
      %795 = vmatprep.subr.bf16.mxu0 %v713
      %796 = vmatpush1.bf16.msra.mxu0 %v712
      %797 = vmatprep.subr.bf16.mxu0 0
      %798 = vmatpush2.bf16.msra.mxu0 0
      %799 = vmatprep.subr.bf16.mxu0 0
      %800 = vmatpush2.bf16.msra.mxu0 0
      %801 = vmatprep.subr.bf16.mxu0 0
      %802 = vmatpush2.bf16.msra.mxu0 0
      %803 = vmatprep.subr.bf16.mxu0 0
      %804 = vmatpush2.bf16.msra.mxu0 0
      %805 = vmatprep.subr.bf16.mxu0 0
      %806 = vmatpush2.bf16.msra.mxu0 0
      %807 = vmatprep.subr.bf16.mxu0 0
      %808 = vmatpush2.bf16.msra.mxu0 0
      %809 = vmatprep.subr.bf16.mxu0 0
      %810 = vmatpush2.bf16.msra.mxu0 0
      %811 = vmatprep.subr.bf16.mxu0 0
      %812 = vmatpush2.bf16.msra.mxu0 0
      %813 = vmatprep.mubr.bf16.mxu0 0
      %814 = vmatmul.mubr.bf16.gmra.mxu0 %v754
      %v815 = vpop.f32.mrf.mxu0
      %v816 = vadd.f32 0.0, %v815
      %v817 = vpop.f32.mrf.mxu0
      %v818 = vadd.f32 0.0, %v817
      %v819 = vpop.f32.mrf.mxu0
      %v820 = vpop.f32.mrf.mxu0
      %821 = vdwg.mxu0
      %822 = vmatprep.subr.bf16.mxu0 0
      %823 = vmatpush1.bf16.msra.mxu0 0
      %824 = vmatprep.subr.bf16.mxu0 0
      %825 = vmatpush1.bf16.msra.mxu0 0
      %826 = vmatprep.subr.bf16.mxu0 0
      %827 = vmatpush1.bf16.msra.mxu0 0
      %828 = vmatprep.subr.bf16.mxu0 0
      %829 = vmatpush1.bf16.msra.mxu0 0
      %830 = vmatprep.subr.bf16.mxu0 0
      %831 = vmatpush1.bf16.msra.mxu0 0
      %832 = vmatprep.subr.bf16.mxu0 %v767
      %833 = vmatpush1.bf16.msra.mxu0 %v764
      %834 = vmatprep.subr.bf16.mxu0 %v723
      %835 = vmatpush1.bf16.msra.mxu0 %v722
      %836 = vmatprep.subr.bf16.mxu0 %v715
      %837 = vmatpush1.bf16.msra.mxu0 %v714
      %838 = vmatprep.subr.bf16.mxu0 0
      %839 = vmatpush2.bf16.msra.mxu0 0
      %840 = vmatprep.subr.bf16.mxu0 0
      %841 = vmatpush2.bf16.msra.mxu0 0
      %842 = vmatprep.subr.bf16.mxu0 0
      %843 = vmatpush2.bf16.msra.mxu0 0
      %844 = vmatprep.subr.bf16.mxu0 0
      %845 = vmatpush2.bf16.msra.mxu0 0
      %846 = vmatprep.subr.bf16.mxu0 0
      %847 = vmatpush2.bf16.msra.mxu0 0
      %848 = vmatprep.subr.bf16.mxu0 0
      %849 = vmatpush2.bf16.msra.mxu0 0
      %850 = vmatprep.subr.bf16.mxu0 0
      %851 = vmatpush2.bf16.msra.mxu0 0
      %852 = vmatprep.subr.bf16.mxu0 0
      %853 = vmatpush2.bf16.msra.mxu0 0
      %854 = vmatprep.mubr.bf16.mxu0 0
      %855 = vmatmul.mubr.bf16.gmra.mxu0 %v754
      %v856 = vpop.f32.mrf.mxu0
      %v857 = vadd.f32 0.0, %v856
      %v858 = vpop.f32.mrf.mxu0
      %v859 = vadd.f32 0.0, %v858
      %v860 = vpop.f32.mrf.mxu0
      %v861 = vpop.f32.mrf.mxu0
      %862 = vdwg.mxu0
      %863 = vmatprep.subr.bf16.mxu0 0
      %864 = vmatpush1.bf16.msra.mxu0 0
      %865 = vmatprep.subr.bf16.mxu0 0
      %866 = vmatpush1.bf16.msra.mxu0 0
      %867 = vmatprep.subr.bf16.mxu0 0
      %868 = vmatpush1.bf16.msra.mxu0 0
      %869 = vmatprep.subr.bf16.mxu0 0
      %870 = vmatpush1.bf16.msra.mxu0 0
      %871 = vmatprep.subr.bf16.mxu0 0
      %872 = vmatpush1.bf16.msra.mxu0 0
      %873 = vmatprep.subr.bf16.mxu0 %v773
      %874 = vmatpush1.bf16.msra.mxu0 %v770
      %875 = vmatprep.subr.bf16.mxu0 %v725
      %876 = vmatpush1.bf16.msra.mxu0 %v724
      %877 = vmatprep.subr.bf16.mxu0 %v717
      %878 = vmatpush1.bf16.msra.mxu0 %v716
      %879 = vmatprep.subr.bf16.mxu0 0
      %880 = vmatpush2.bf16.msra.mxu0 0
      %881 = vmatprep.subr.bf16.mxu0 0
      %882 = vmatpush2.bf16.msra.mxu0 0
      %883 = vmatprep.subr.bf16.mxu0 0
      %884 = vmatpush2.bf16.msra.mxu0 0
      %885 = vmatprep.subr.bf16.mxu0 0
      %886 = vmatpush2.bf16.msra.mxu0 0
      %887 = vmatprep.subr.bf16.mxu0 0
      %888 = vmatpush2.bf16.msra.mxu0 0
      %889 = vmatprep.subr.bf16.mxu0 0
      %890 = vmatpush2.bf16.msra.mxu0 0
      %891 = vmatprep.subr.bf16.mxu0 0
      %892 = vmatpush2.bf16.msra.mxu0 0
      %893 = vmatprep.subr.bf16.mxu0 0
      %894 = vmatpush2.bf16.msra.mxu0 0
      %895 = vmatprep.mubr.bf16.mxu0 0
      %896 = vmatmul.mubr.bf16.gmra.mxu0 %v754
      %v897 = vpop.f32.mrf.mxu0
      %v898 = vadd.f32 0.0, %v897
      %v899 = vpop.f32.mrf.mxu0
      %v900 = vadd.f32 0.0, %v899
      %v901 = vpop.f32.mrf.mxu0
      %v902 = vpop.f32.mrf.mxu0
      %903 = vdwg.mxu0
      %904 = vmatprep.subr.bf16.mxu0 0
      %905 = vmatpush1.bf16.msra.mxu0 0
      %906 = vmatprep.subr.bf16.mxu0 0
      %907 = vmatpush1.bf16.msra.mxu0 0
      %908 = vmatprep.subr.bf16.mxu0 0
      %909 = vmatpush1.bf16.msra.mxu0 0
      %910 = vmatprep.subr.bf16.mxu0 0
      %911 = vmatpush1.bf16.msra.mxu0 0
      %912 = vmatprep.subr.bf16.mxu0 0
      %913 = vmatpush1.bf16.msra.mxu0 0
      %914 = vmatprep.subr.bf16.mxu0 %v779
      %915 = vmatpush1.bf16.msra.mxu0 %v776
      %916 = vmatprep.subr.bf16.mxu0 %v727
      %917 = vmatpush1.bf16.msra.mxu0 %v726
      %918 = vmatprep.subr.bf16.mxu0 %v719
      %919 = vmatpush1.bf16.msra.mxu0 %v718
      %920 = vmatprep.subr.bf16.mxu0 0
      %921 = vmatpush2.bf16.msra.mxu0 0
      %922 = vmatprep.subr.bf16.mxu0 0
      %923 = vmatpush2.bf16.msra.mxu0 0
      %924 = vmatprep.subr.bf16.mxu0 0
      %925 = vmatpush2.bf16.msra.mxu0 0
      %926 = vmatprep.subr.bf16.mxu0 0
      %927 = vmatpush2.bf16.msra.mxu0 0
      %928 = vmatprep.subr.bf16.mxu0 0
      %929 = vmatpush2.bf16.msra.mxu0 0
      %930 = vmatprep.subr.bf16.mxu0 0
      %931 = vmatpush2.bf16.msra.mxu0 0
      %932 = vmatprep.subr.bf16.mxu0 0
      %933 = vmatpush2.bf16.msra.mxu0 0
      %934 = vmatprep.subr.bf16.mxu0 0
      %935 = vmatpush2.bf16.msra.mxu0 0
      %936 = vmatprep.mubr.bf16.mxu0 0
      %937 = vmatmul.mubr.bf16.gmra.mxu0 %v754
      %v938 = vpop.f32.mrf.mxu0
      %v939 = vadd.f32 0.0, %v938
      %v940 = vpop.f32.mrf.mxu0
      %v941 = vadd.f32 0.0, %v940
      %v942 = vpop.f32.mrf.mxu0
      %v943 = vpop.f32.mrf.mxu0
      %944 = vdwg.mxu0
      %v946 = vsel %vm752, %v571, 0
      %v949 = vsel %vm756, %v563, 0
      %v952 = vsel %vm756, %v564, 0
      %v955 = vsel %vm756, %v565, 0
      %v958 = vsel %vm756, %v566, 0
      %v961 = vsel %vm756, %v567, 0
      %v964 = vsel %vm756, %v568, 0
      %v967 = vsel %vm756, %v569, 0
      %v970 = vsel %vm756, %v570, 0
      %972 = vmatprep.subr.bf16.mxu0 0
      %973 = vmatpush1.bf16.msra.mxu0 0
      %974 = vmatprep.subr.bf16.mxu0 0
      %975 = vmatpush1.bf16.msra.mxu0 0
      %976 = vmatprep.subr.bf16.mxu0 0
      %977 = vmatpush1.bf16.msra.mxu0 0
      %978 = vmatprep.subr.bf16.mxu0 0
      %979 = vmatpush1.bf16.msra.mxu0 0
      %980 = vmatprep.subr.bf16.mxu0 0
      %981 = vmatpush1.bf16.msra.mxu0 0
      %982 = vmatprep.subr.bf16.mxu0 %v952
      %983 = vmatpush1.bf16.msra.mxu0 %v949
      %984 = vmatprep.subr.bf16.mxu0 %v556
      %985 = vmatpush1.bf16.msra.mxu0 %v555
      %986 = vmatprep.subr.bf16.mxu0 %v548
      %987 = vmatpush1.bf16.msra.mxu0 %v547
      %988 = vmatprep.subr.bf16.mxu0 0
      %989 = vmatpush2.bf16.msra.mxu0 0
      %990 = vmatprep.subr.bf16.mxu0 0
      %991 = vmatpush2.bf16.msra.mxu0 0
      %992 = vmatprep.subr.bf16.mxu0 0
      %993 = vmatpush2.bf16.msra.mxu0 0
      %994 = vmatprep.subr.bf16.mxu0 0
      %995 = vmatpush2.bf16.msra.mxu0 0
      %996 = vmatprep.subr.bf16.mxu0 0
      %997 = vmatpush2.bf16.msra.mxu0 0
      %998 = vmatprep.subr.bf16.mxu0 0
      %999 = vmatpush2.bf16.msra.mxu0 0
      %1000 = vmatprep.subr.bf16.mxu0 0
      %1001 = vmatpush2.bf16.msra.mxu0 0
      %1002 = vmatprep.subr.bf16.mxu0 0
      %1003 = vmatpush2.bf16.msra.mxu0 0
      %1004 = vmatprep.mubr.bf16.mxu0 0
      %1005 = vmatmul.mubr.bf16.gmra.mxu0 %v946
      %v1006 = vpop.f32.mrf.mxu0
      %v1007 = vadd.f32 %v816, %v1006
      %v1008 = vpop.f32.mrf.mxu0
      %v1009 = vadd.f32 %v818, %v1008
      %v1010 = vpop.f32.mrf.mxu0
      %v1011 = vpop.f32.mrf.mxu0
      %1012 = vdwg.mxu0
      %1013 = vmatprep.subr.bf16.mxu0 0
      %1014 = vmatpush1.bf16.msra.mxu0 0
      %1015 = vmatprep.subr.bf16.mxu0 0
      %1016 = vmatpush1.bf16.msra.mxu0 0
      %1017 = vmatprep.subr.bf16.mxu0 0
      %1018 = vmatpush1.bf16.msra.mxu0 0
      %1019 = vmatprep.subr.bf16.mxu0 0
      %1020 = vmatpush1.bf16.msra.mxu0 0
      %1021 = vmatprep.subr.bf16.mxu0 0
      %1022 = vmatpush1.bf16.msra.mxu0 0
      %1023 = vmatprep.subr.bf16.mxu0 %v958
      %1024 = vmatpush1.bf16.msra.mxu0 %v955
      %1025 = vmatprep.subr.bf16.mxu0 %v558
      %1026 = vmatpush1.bf16.msra.mxu0 %v557
      %1027 = vmatprep.subr.bf16.mxu0 %v550
      %1028 = vmatpush1.bf16.msra.mxu0 %v549
      %1029 = vmatprep.subr.bf16.mxu0 0
      %1030 = vmatpush2.bf16.msra.mxu0 0
      %1031 = vmatprep.subr.bf16.mxu0 0
      %1032 = vmatpush2.bf16.msra.mxu0 0
      %1033 = vmatprep.subr.bf16.mxu0 0
      %1034 = vmatpush2.bf16.msra.mxu0 0
      %1035 = vmatprep.subr.bf16.mxu0 0
      %1036 = vmatpush2.bf16.msra.mxu0 0
      %1037 = vmatprep.subr.bf16.mxu0 0
      %1038 = vmatpush2.bf16.msra.mxu0 0
      %1039 = vmatprep.subr.bf16.mxu0 0
      %1040 = vmatpush2.bf16.msra.mxu0 0
      %1041 = vmatprep.subr.bf16.mxu0 0
      %1042 = vmatpush2.bf16.msra.mxu0 0
      %1043 = vmatprep.subr.bf16.mxu0 0
      %1044 = vmatpush2.bf16.msra.mxu0 0
      %1045 = vmatprep.mubr.bf16.mxu0 0
      %1046 = vmatmul.mubr.bf16.gmra.mxu0 %v946
      %v1047 = vpop.f32.mrf.mxu0
      %v1048 = vadd.f32 %v857, %v1047
      %v1049 = vpop.f32.mrf.mxu0
      %v1050 = vadd.f32 %v859, %v1049
      %v1051 = vpop.f32.mrf.mxu0
      %v1052 = vpop.f32.mrf.mxu0
      %1053 = vdwg.mxu0
      %1054 = vmatprep.subr.bf16.mxu0 0
      %1055 = vmatpush1.bf16.msra.mxu0 0
      %1056 = vmatprep.subr.bf16.mxu0 0
      %1057 = vmatpush1.bf16.msra.mxu0 0
      %1058 = vmatprep.subr.bf16.mxu0 0
      %1059 = vmatpush1.bf16.msra.mxu0 0
      %1060 = vmatprep.subr.bf16.mxu0 0
      %1061 = vmatpush1.bf16.msra.mxu0 0
      %1062 = vmatprep.subr.bf16.mxu0 0
      %1063 = vmatpush1.bf16.msra.mxu0 0
      %1064 = vmatprep.subr.bf16.mxu0 %v964
      %1065 = vmatpush1.bf16.msra.mxu0 %v961
      %1066 = vmatprep.subr.bf16.mxu0 %v560
      %1067 = vmatpush1.bf16.msra.mxu0 %v559
      %1068 = vmatprep.subr.bf16.mxu0 %v552
      %1069 = vmatpush1.bf16.msra.mxu0 %v551
      %1070 = vmatprep.subr.bf16.mxu0 0
      %1071 = vmatpush2.bf16.msra.mxu0 0
      %1072 = vmatprep.subr.bf16.mxu0 0
      %1073 = vmatpush2.bf16.msra.mxu0 0
      %1074 = vmatprep.subr.bf16.mxu0 0
      %1075 = vmatpush2.bf16.msra.mxu0 0
      %1076 = vmatprep.subr.bf16.mxu0 0
      %1077 = vmatpush2.bf16.msra.mxu0 0
      %1078 = vmatprep.subr.bf16.mxu0 0
      %1079 = vmatpush2.bf16.msra.mxu0 0
      %1080 = vmatprep.subr.bf16.mxu0 0
      %1081 = vmatpush2.bf16.msra.mxu0 0
      %1082 = vmatprep.subr.bf16.mxu0 0
      %1083 = vmatpush2.bf16.msra.mxu0 0
      %1084 = vmatprep.subr.bf16.mxu0 0
      %1085 = vmatpush2.bf16.msra.mxu0 0
      %1086 = vmatprep.mubr.bf16.mxu0 0
      %1087 = vmatmul.mubr.bf16.gmra.mxu0 %v946
      %v1088 = vpop.f32.mrf.mxu0
      %v1089 = vadd.f32 %v898, %v1088
      %v1090 = vpop.f32.mrf.mxu0
      %v1091 = vadd.f32 %v900, %v1090
      %v1092 = vpop.f32.mrf.mxu0
      %v1093 = vpop.f32.mrf.mxu0
      %1094 = vdwg.mxu0
      %1095 = vmatprep.subr.bf16.mxu0 0
      %1096 = vmatpush1.bf16.msra.mxu0 0
      %1097 = vmatprep.subr.bf16.mxu0 0
      %1098 = vmatpush1.bf16.msra.mxu0 0
      %1099 = vmatprep.subr.bf16.mxu0 0
      %1100 = vmatpush1.bf16.msra.mxu0 0
      %1101 = vmatprep.subr.bf16.mxu0 0
      %1102 = vmatpush1.bf16.msra.mxu0 0
      %1103 = vmatprep.subr.bf16.mxu0 0
      %1104 = vmatpush1.bf16.msra.mxu0 0
      %1105 = vmatprep.subr.bf16.mxu0 %v970
      %1106 = vmatpush1.bf16.msra.mxu0 %v967
      %1107 = vmatprep.subr.bf16.mxu0 %v562
      %1108 = vmatpush1.bf16.msra.mxu0 %v561
      %1109 = vmatprep.subr.bf16.mxu0 %v554
      %1110 = vmatpush1.bf16.msra.mxu0 %v553
      %1111 = vmatprep.subr.bf16.mxu0 0
      %1112 = vmatpush2.bf16.msra.mxu0 0
      %1113 = vmatprep.subr.bf16.mxu0 0
      %1114 = vmatpush2.bf16.msra.mxu0 0
      %1115 = vmatprep.subr.bf16.mxu0 0
      %1116 = vmatpush2.bf16.msra.mxu0 0
      %1117 = vmatprep.subr.bf16.mxu0 0
      %1118 = vmatpush2.bf16.msra.mxu0 0
      %1119 = vmatprep.subr.bf16.mxu0 0
      %1120 = vmatpush2.bf16.msra.mxu0 0
      %1121 = vmatprep.subr.bf16.mxu0 0
      %1122 = vmatpush2.bf16.msra.mxu0 0
      %1123 = vmatprep.subr.bf16.mxu0 0
      %1124 = vmatpush2.bf16.msra.mxu0 0
      %1125 = vmatprep.subr.bf16.mxu0 0
      %1126 = vmatpush2.bf16.msra.mxu0 0
      %1127 = vmatprep.mubr.bf16.mxu0 0
      %1128 = vmatmul.mubr.bf16.gmra.mxu0 %v946
      %v1129 = vpop.f32.mrf.mxu0
      %v1130 = vadd.f32 %v939, %v1129
      %v1131 = vpop.f32.mrf.mxu0
      %v1132 = vadd.f32 %v941, %v1131
      %v1133 = vpop.f32.mrf.mxu0
      %v1134 = vpop.f32.mrf.mxu0
      %1135 = vdwg.mxu0
      %v1137 = vrot.slane 0.0, 4
      %1138 = vrot.lane.b32.xlu0 %v1137, 127
      %v1139 = vpop.permute.xlu0 %1138
      %v1140 = vsel %vm274, %v575, %v1139
      %1143 = vrot.lane.b32.xlu0 0.0, 126
      %v1144 = vpop.permute.xlu0 %1143
      %v1145 = vsel %vm306, %v580, %v1144
      %1148 = vrot.lane.b32.xlu0 %v1137, 118
      %v1149 = vpop.permute.xlu0 %1148
      %v1150 = vsel %vm338, %v585, %v1149
      %1153 = vrot.lane.b32.xlu0 0.0, 117
      %v1154 = vpop.permute.xlu0 %1153
      %v1155 = vsel %vm370, %v590, %v1154
      %1158 = vrot.lane.b32.xlu0 %v1137, 116
      %v1159 = vpop.permute.xlu0 %1158
      %v1160 = vsel %vm402, %v595, %v1159
      %1163 = vrot.lane.b32.xlu0 0.0, 108
      %v1164 = vpop.permute.xlu0 %1163
      %v1165 = vsel %vm434, %v600, %v1164
      %1168 = vrot.lane.b32.xlu0 %v1137, 107
      %v1169 = vpop.permute.xlu0 %1168
      %v1170 = vsel %vm466, %v605, %v1169
      %1173 = vrot.lane.b32.xlu0 0.0, 106
      %v1174 = vpop.permute.xlu0 %1173
      %v1175 = vsel %vm498, %v610, %v1174
      %v1178 = vsel %vm514, %v248, %v1140
      %v1179 = vsel %vm514, 0.0, %v1139
      %v1180 = vsel %vm514, %v1145, %v1150
      %v1181 = vsel %vm514, %v1144, %v1149
      %v1182 = vsel %vm514, %v1155, %v1160
      %v1183 = vsel %vm514, %v1154, %v1159
      %v1184 = vsel %vm514, %v1165, %v1170
      %v1185 = vsel %vm514, %v1164, %v1169
      %v1186 = vpack.c.bf16 %v1180, %v1178
      %v1187 = vpack.c.bf16 %v1181, %v1179
      %v1188 = vpack.c.bf16 %v1184, %v1182
      %v1189 = vpack.c.bf16 %v1185, %v1183
      %v1190 = vpack.c.bf16 %v1175, %v1175
      %v1191 = vpack.c.bf16 %v1174, %v1174
      %s1192 = scalar_lea.vmem %s1, 4
      %v1193 = vld [vmem:[%s1192] sm:$0x3]
      %1200 = vrot.lane.b32.xlu0 %v548, 56
      %v1201 = vpop.permute.xlu0 %1200
      %1202 = vrot.lane.b32.xlu0 %v549, 56
      %v1203 = vpop.permute.xlu0 %1202
      %1204 = vrot.lane.b32.xlu0 %v550, 56
      %v1205 = vpop.permute.xlu0 %1204
      %1206 = vrot.lane.b32.xlu0 %v551, 56
      %v1207 = vpop.permute.xlu0 %1206
      %1208 = vrot.lane.b32.xlu0 %v552, 56
      %v1209 = vpop.permute.xlu0 %1208
      %1210 = vrot.lane.b32.xlu0 %v553, 56
      %v1211 = vpop.permute.xlu0 %1210
      %1212 = vrot.lane.b32.xlu0 %v622, 56
      %v1213 = vpop.permute.xlu0 %1212
      %1214 = vrot.lane.b32.xlu0 %v1186, 56
      %v1215 = vpop.permute.xlu0 %1214
      %1216 = vrot.lane.b32.xlu0 %v1187, 56
      %v1217 = vpop.permute.xlu0 %1216
      %1218 = vrot.lane.b32.xlu0 %v556, 56
      %v1219 = vpop.permute.xlu0 %1218
      %1220 = vrot.lane.b32.xlu0 %v557, 56
      %v1221 = vpop.permute.xlu0 %1220
      %1222 = vrot.lane.b32.xlu0 %v558, 56
      %v1223 = vpop.permute.xlu0 %1222
      %1224 = vrot.lane.b32.xlu0 %v559, 56
      %v1225 = vpop.permute.xlu0 %1224
      %1226 = vrot.lane.b32.xlu0 %v560, 56
      %v1227 = vpop.permute.xlu0 %1226
      %1228 = vrot.lane.b32.xlu0 %v561, 56
      %v1229 = vpop.permute.xlu0 %1228
      %1230 = vrot.lane.b32.xlu0 %v624, 56
      %v1231 = vpop.permute.xlu0 %1230
      %1232 = vrot.lane.b32.xlu0 %v1188, 56
      %v1233 = vpop.permute.xlu0 %1232
      %1234 = vrot.lane.b32.xlu0 %v1189, 56
      %v1235 = vpop.permute.xlu0 %1234
      %1236 = vrot.lane.b32.xlu0 %v564, 56
      %v1237 = vpop.permute.xlu0 %1236
      %1238 = vrot.lane.b32.xlu0 %v565, 56
      %v1239 = vpop.permute.xlu0 %1238
      %1240 = vrot.lane.b32.xlu0 %v566, 56
      %v1241 = vpop.permute.xlu0 %1240
      %1242 = vrot.lane.b32.xlu0 %v567, 56
      %v1243 = vpop.permute.xlu0 %1242
      %1244 = vrot.lane.b32.xlu0 %v568, 56
      %v1245 = vpop.permute.xlu0 %1244
      %1246 = vrot.lane.b32.xlu0 %v569, 56
      %v1247 = vpop.permute.xlu0 %1246
      %1248 = vrot.lane.b32.xlu0 %v626, 56
      %v1249 = vpop.permute.xlu0 %1248
      %1250 = vrot.lane.b32.xlu0 %v1190, 56
      %v1251 = vpop.permute.xlu0 %1250
      %1252 = vrot.lane.b32.xlu0 %v1191, 56
      %v1253 = vpop.permute.xlu0 %1252
      %vm1254 = vcmask 457728
      %v1255 = vsel %vm1254, %v1201, %v1203
      %v1256 = vsel %vm1254, %v1203, %v1205
      %v1257 = vsel %vm1254, %v1205, %v1207
      %v1258 = vsel %vm1254, %v1207, %v1209
      %v1259 = vsel %vm1254, %v1209, %v1211
      %v1260 = vsel %vm1254, %v1211, %v1213
      %v1261 = vsel %vm1254, %v1213, %v1215
      %v1262 = vsel %vm1254, %v1215, %v1217
      %v1263 = vsel %vm1254, %v1219, %v1221
      %v1264 = vsel %vm1254, %v1221, %v1223
      %v1265 = vsel %vm1254, %v1223, %v1225
      %v1266 = vsel %vm1254, %v1225, %v1227
      %v1267 = vsel %vm1254, %v1227, %v1229
      %v1268 = vsel %vm1254, %v1229, %v1231
      %v1269 = vsel %vm1254, %v1231, %v1233
      %v1270 = vsel %vm1254, %v1233, %v1235
      %v1271 = vsel %vm1254, %v1237, %v1239
      %v1272 = vsel %vm1254, %v1239, %v1241
      %v1273 = vsel %vm1254, %v1241, %v1243
      %v1274 = vsel %vm1254, %v1243, %v1245
      %v1275 = vsel %vm1254, %v1245, %v1247
      %v1276 = vsel %vm1254, %v1247, %v1249
      %v1277 = vsel %vm1254, %v1249, %v1251
      %v1278 = vsel %vm1254, %v1251, %v1253
      %v1296 = vsel %vm752, %v1193, 0
      %v1299 = vsel %vm756, %v1271, 0
      %v1302 = vsel %vm756, %v1272, 0
      %v1305 = vsel %vm756, %v1273, 0
      %v1308 = vsel %vm756, %v1274, 0
      %v1311 = vsel %vm756, %v1275, 0
      %v1314 = vsel %vm756, %v1276, 0
      %v1317 = vsel %vm756, %v1277, 0
      %v1320 = vsel %vm756, %v1278, 0
      %1322 = vmatprep.subr.bf16.mxu0 0
      %1323 = vmatpush1.bf16.msra.mxu0 0
      %1324 = vmatprep.subr.bf16.mxu0 0
      %1325 = vmatpush1.bf16.msra.mxu0 0
      %1326 = vmatprep.subr.bf16.mxu0 0
      %1327 = vmatpush1.bf16.msra.mxu0 0
      %1328 = vmatprep.subr.bf16.mxu0 0
      %1329 = vmatpush1.bf16.msra.mxu0 0
      %1330 = vmatprep.subr.bf16.mxu0 0
      %1331 = vmatpush1.bf16.msra.mxu0 0
      %1332 = vmatprep.subr.bf16.mxu0 %v1302
      %1333 = vmatpush1.bf16.msra.mxu0 %v1299
      %1334 = vmatprep.subr.bf16.mxu0 %v1264
      %1335 = vmatpush1.bf16.msra.mxu0 %v1263
      %1336 = vmatprep.subr.bf16.mxu0 %v1256
      %1337 = vmatpush1.bf16.msra.mxu0 %v1255
      %1338 = vmatprep.subr.bf16.mxu0 0
      %1339 = vmatpush2.bf16.msra.mxu0 0
      %1340 = vmatprep.subr.bf16.mxu0 0
      %1341 = vmatpush2.bf16.msra.mxu0 0
      %1342 = vmatprep.subr.bf16.mxu0 0
      %1343 = vmatpush2.bf16.msra.mxu0 0
      %1344 = vmatprep.subr.bf16.mxu0 0
      %1345 = vmatpush2.bf16.msra.mxu0 0
      %1346 = vmatprep.subr.bf16.mxu0 0
      %1347 = vmatpush2.bf16.msra.mxu0 0
      %1348 = vmatprep.subr.bf16.mxu0 0
      %1349 = vmatpush2.bf16.msra.mxu0 0
      %1350 = vmatprep.subr.bf16.mxu0 0
      %1351 = vmatpush2.bf16.msra.mxu0 0
      %1352 = vmatprep.subr.bf16.mxu0 0
      %1353 = vmatpush2.bf16.msra.mxu0 0
      %1354 = vmatprep.mubr.bf16.mxu0 0
      %1355 = vmatmul.mubr.bf16.gmra.mxu0 %v1296
      %v1356 = vpop.f32.mrf.mxu0
      %v1357 = vadd.f32 0.0, %v1356
      %v1358 = vpop.f32.mrf.mxu0
      %v1359 = vadd.f32 0.0, %v1358
      %v1360 = vpop.f32.mrf.mxu0
      %v1361 = vpop.f32.mrf.mxu0
      %1362 = vdwg.mxu0
      %1363 = vmatprep.subr.bf16.mxu0 0
      %1364 = vmatpush1.bf16.msra.mxu0 0
      %1365 = vmatprep.subr.bf16.mxu0 0
      %1366 = vmatpush1.bf16.msra.mxu0 0
      %1367 = vmatprep.subr.bf16.mxu0 0
      %1368 = vmatpush1.bf16.msra.mxu0 0
      %1369 = vmatprep.subr.bf16.mxu0 0
      %1370 = vmatpush1.bf16.msra.mxu0 0
      %1371 = vmatprep.subr.bf16.mxu0 0
      %1372 = vmatpush1.bf16.msra.mxu0 0
      %1373 = vmatprep.subr.bf16.mxu0 %v1308
      %1374 = vmatpush1.bf16.msra.mxu0 %v1305
      %1375 = vmatprep.subr.bf16.mxu0 %v1266
      %1376 = vmatpush1.bf16.msra.mxu0 %v1265
      %1377 = vmatprep.subr.bf16.mxu0 %v1258
      %1378 = vmatpush1.bf16.msra.mxu0 %v1257
      %1379 = vmatprep.subr.bf16.mxu0 0
      %1380 = vmatpush2.bf16.msra.mxu0 0
      %1381 = vmatprep.subr.bf16.mxu0 0
      %1382 = vmatpush2.bf16.msra.mxu0 0
      %1383 = vmatprep.subr.bf16.mxu0 0
      %1384 = vmatpush2.bf16.msra.mxu0 0
      %1385 = vmatprep.subr.bf16.mxu0 0
      %1386 = vmatpush2.bf16.msra.mxu0 0
      %1387 = vmatprep.subr.bf16.mxu0 0
      %1388 = vmatpush2.bf16.msra.mxu0 0
      %1389 = vmatprep.subr.bf16.mxu0 0
      %1390 = vmatpush2.bf16.msra.mxu0 0
      %1391 = vmatprep.subr.bf16.mxu0 0
      %1392 = vmatpush2.bf16.msra.mxu0 0
      %1393 = vmatprep.subr.bf16.mxu0 0
      %1394 = vmatpush2.bf16.msra.mxu0 0
      %1395 = vmatprep.mubr.bf16.mxu0 0
      %1396 = vmatmul.mubr.bf16.gmra.mxu0 %v1296
      %v1397 = vpop.f32.mrf.mxu0
      %v1398 = vadd.f32 0.0, %v1397
      %v1399 = vpop.f32.mrf.mxu0
      %v1400 = vadd.f32 0.0, %v1399
      %v1401 = vpop.f32.mrf.mxu0
      %v1402 = vpop.f32.mrf.mxu0
      %1403 = vdwg.mxu0
      %1404 = vmatprep.subr.bf16.mxu0 0
      %1405 = vmatpush1.bf16.msra.mxu0 0
      %1406 = vmatprep.subr.bf16.mxu0 0
      %1407 = vmatpush1.bf16.msra.mxu0 0
      %1408 = vmatprep.subr.bf16.mxu0 0
      %1409 = vmatpush1.bf16.msra.mxu0 0
      %1410 = vmatprep.subr.bf16.mxu0 0
      %1411 = vmatpush1.bf16.msra.mxu0 0
      %1412 = vmatprep.subr.bf16.mxu0 0
      %1413 = vmatpush1.bf16.msra.mxu0 0
      %1414 = vmatprep.subr.bf16.mxu0 %v1314
      %1415 = vmatpush1.bf16.msra.mxu0 %v1311
      %1416 = vmatprep.subr.bf16.mxu0 %v1268
      %1417 = vmatpush1.bf16.msra.mxu0 %v1267
      %1418 = vmatprep.subr.bf16.mxu0 %v1260
      %1419 = vmatpush1.bf16.msra.mxu0 %v1259
      %1420 = vmatprep.subr.bf16.mxu0 0
      %1421 = vmatpush2.bf16.msra.mxu0 0
      %1422 = vmatprep.subr.bf16.mxu0 0
      %1423 = vmatpush2.bf16.msra.mxu0 0
      %1424 = vmatprep.subr.bf16.mxu0 0
      %1425 = vmatpush2.bf16.msra.mxu0 0
      %1426 = vmatprep.subr.bf16.mxu0 0
      %1427 = vmatpush2.bf16.msra.mxu0 0
      %1428 = vmatprep.subr.bf16.mxu0 0
      %1429 = vmatpush2.bf16.msra.mxu0 0
      %1430 = vmatprep.subr.bf16.mxu0 0
      %1431 = vmatpush2.bf16.msra.mxu0 0
      %1432 = vmatprep.subr.bf16.mxu0 0
      %1433 = vmatpush2.bf16.msra.mxu0 0
      %1434 = vmatprep.subr.bf16.mxu0 0
      %1435 = vmatpush2.bf16.msra.mxu0 0
      %1436 = vmatprep.mubr.bf16.mxu0 0
      %1437 = vmatmul.mubr.bf16.gmra.mxu0 %v1296
      %v1438 = vpop.f32.mrf.mxu0
      %v1439 = vadd.f32 0.0, %v1438
      %v1440 = vpop.f32.mrf.mxu0
      %v1441 = vadd.f32 0.0, %v1440
      %v1442 = vpop.f32.mrf.mxu0
      %v1443 = vpop.f32.mrf.mxu0
      %1444 = vdwg.mxu0
      %1445 = vmatprep.subr.bf16.mxu0 0
      %1446 = vmatpush1.bf16.msra.mxu0 0
      %1447 = vmatprep.subr.bf16.mxu0 0
      %1448 = vmatpush1.bf16.msra.mxu0 0
      %1449 = vmatprep.subr.bf16.mxu0 0
      %1450 = vmatpush1.bf16.msra.mxu0 0
      %1451 = vmatprep.subr.bf16.mxu0 0
      %1452 = vmatpush1.bf16.msra.mxu0 0
      %1453 = vmatprep.subr.bf16.mxu0 0
      %1454 = vmatpush1.bf16.msra.mxu0 0
      %1455 = vmatprep.subr.bf16.mxu0 %v1320
      %1456 = vmatpush1.bf16.msra.mxu0 %v1317
      %1457 = vmatprep.subr.bf16.mxu0 %v1270
      %1458 = vmatpush1.bf16.msra.mxu0 %v1269
      %1459 = vmatprep.subr.bf16.mxu0 %v1262
      %1460 = vmatpush1.bf16.msra.mxu0 %v1261
      %1461 = vmatprep.subr.bf16.mxu0 0
      %1462 = vmatpush2.bf16.msra.mxu0 0
      %1463 = vmatprep.subr.bf16.mxu0 0
      %1464 = vmatpush2.bf16.msra.mxu0 0
      %1465 = vmatprep.subr.bf16.mxu0 0
      %1466 = vmatpush2.bf16.msra.mxu0 0
      %1467 = vmatprep.subr.bf16.mxu0 0
      %1468 = vmatpush2.bf16.msra.mxu0 0
      %1469 = vmatprep.subr.bf16.mxu0 0
      %1470 = vmatpush2.bf16.msra.mxu0 0
      %1471 = vmatprep.subr.bf16.mxu0 0
      %1472 = vmatpush2.bf16.msra.mxu0 0
      %1473 = vmatprep.subr.bf16.mxu0 0
      %1474 = vmatpush2.bf16.msra.mxu0 0
      %1475 = vmatprep.subr.bf16.mxu0 0
      %1476 = vmatpush2.bf16.msra.mxu0 0
      %1477 = vmatprep.mubr.bf16.mxu0 0
      %1478 = vmatmul.mubr.bf16.gmra.mxu0 %v1296
      %v1479 = vpop.f32.mrf.mxu0
      %v1480 = vadd.f32 0.0, %v1479
      %v1481 = vpop.f32.mrf.mxu0
      %v1482 = vadd.f32 0.0, %v1481
      %v1483 = vpop.f32.mrf.mxu0
      %v1484 = vpop.f32.mrf.mxu0
      %1485 = vdwg.mxu0
      %v1486 = vadd.f32 %v1007, %v1357
      %v1487 = vadd.f32 %v1009, %v1359
      %v1488 = vadd.f32 %v1048, %v1398
      %v1489 = vadd.f32 %v1050, %v1400
      %v1490 = vadd.f32 %v1089, %v1439
      %v1491 = vadd.f32 %v1091, %v1441
      %v1492 = vadd.f32 %v1130, %v1480
      %v1493 = vadd.f32 %v1132, %v1482
      %v1494 = vld [vmem:[%s2] sm:$0xf]
      %1496 = vset.pattern.permute.xlu0 0
      %1497 = vperm.xlu0 %1496, %v1494
      %v1498 = vpop.permute.xlu0 %1497
      %v1500 = vadd.f32 %v1486, %v1498
      %v1501 = vadd.f32 %v1487, %v1498
      %v1502 = vadd.f32 %v1488, %v1498
      %v1503 = vadd.f32 %v1489, %v1498
      %v1504 = vadd.f32 %v1490, %v1498
      %v1505 = vadd.f32 %v1491, %v1498
      %v1506 = vadd.f32 %v1492, %v1498
      %v1507 = vadd.f32 %v1493, %v1498
      %v1508 = vmax.f32 %v1500, 0.0
      %v1509 = vmax.f32 %v1501, 0.0
      %v1510 = vmax.f32 %v1502, 0.0
      %v1511 = vmax.f32 %v1503, 0.0
      %v1512 = vmax.f32 %v1504, 0.0
      %v1513 = vmax.f32 %v1505, 0.0
      %v1514 = vmax.f32 %v1506, 0.0
      %v1515 = vmax.f32 %v1507, 0.0
      %v1516 = vsel %vm200, 1, 0
      %v1517 = vlaneseq
      %v1518 = vshrl.u32 %v1517, 7
      %v1519 = vsub.s32 0, %v1518
      %v1520 = vrot.slane %v1516, %v1519
      %v1521 = vlaneseq
      %v1522 = vshrl.u32 %v1521, 7
      %v1523 = vsub.s32 1, %v1522
      %v1524 = vrot.slane %v1516, %v1523
      %v1525 = vlaneseq
      %v1526 = vshrl.u32 %v1525, 7
      %v1527 = vsub.s32 2, %v1526
      %v1528 = vrot.slane %v1516, %v1527
      %v1529 = vlaneseq
      %v1530 = vshrl.u32 %v1529, 7
      %v1531 = vsub.s32 3, %v1530
      %v1532 = vrot.slane %v1516, %v1531
      %v1533 = vlaneseq
      %v1534 = vshrl.u32 %v1533, 7
      %v1535 = vsub.s32 4, %v1534
      %v1536 = vrot.slane %v1516, %v1535
      %v1537 = vlaneseq
      %v1538 = vshrl.u32 %v1537, 7
      %v1539 = vsub.s32 5, %v1538
      %v1540 = vrot.slane %v1516, %v1539
      %v1541 = vlaneseq
      %v1542 = vshrl.u32 %v1541, 7
      %v1543 = vsub.s32 6, %v1542
      %v1544 = vrot.slane %v1516, %v1543
      %v1545 = vlaneseq
      %v1546 = vshrl.u32 %v1545, 7
      %v1547 = vsub.s32 7, %v1546
      %v1548 = vrot.slane %v1516, %v1547
      %vm1549 = vcmp.eq.s32.totalorder %v1520, 1
      %vm1550 = vcmp.eq.s32.totalorder %v1524, 1
      %vm1551 = vcmp.eq.s32.totalorder %v1528, 1
      %vm1552 = vcmp.eq.s32.totalorder %v1532, 1
      %vm1553 = vcmp.eq.s32.totalorder %v1536, 1
      %vm1554 = vcmp.eq.s32.totalorder %v1540, 1
      %vm1555 = vcmp.eq.s32.totalorder %v1544, 1
      %vm1556 = vcmp.eq.s32.totalorder %v1548, 1
      %v1557 = vsel %vm1549, %v1508, 0.0
      %v1558 = vsel %vm1550, %v1509, 0.0
      %v1559 = vsel %vm1551, %v1510, 0.0
      %v1560 = vsel %vm1552, %v1511, 0.0
      %v1561 = vsel %vm1553, %v1512, 0.0
      %v1562 = vsel %vm1554, %v1513, 0.0
      %v1563 = vsel %vm1555, %v1514, 0.0
      %v1564 = vsel %vm1556, %v1515, 0.0
      %1573 = vrot.lane.b32.xlu0 %v1557, 111
      %v1574 = vpop.permute.xlu0 %1573
      %1575 = vrot.lane.b32.xlu0 %v1558, 111
      %v1576 = vpop.permute.xlu0 %1575
      %1577 = vrot.lane.b32.xlu0 %v1559, 111
      %v1578 = vpop.permute.xlu0 %1577
      %1579 = vrot.lane.b32.xlu0 %v1560, 111
      %v1580 = vpop.permute.xlu0 %1579
      %1581 = vrot.lane.b32.xlu0 %v1561, 111
      %v1582 = vpop.permute.xlu0 %1581
      %1583 = vrot.lane.b32.xlu0 %v1562, 111
      %v1584 = vpop.permute.xlu0 %1583
      %1585 = vrot.lane.b32.xlu0 %v1563, 111
      %v1586 = vpop.permute.xlu0 %1585
      %1587 = vrot.lane.b32.xlu0 %v1564, 111
      %v1588 = vpop.permute.xlu0 %1587
      %v1589 = vsel %vm229, %v1574, %v1576
      %v1590 = vsel %vm229, %v1576, %v1578
      %v1591 = vsel %vm229, %v1578, %v1580
      %v1592 = vsel %vm229, %v1580, %v1582
      %v1593 = vsel %vm229, %v1582, %v1584
      %v1594 = vsel %vm229, %v1584, %v1586
      %v1595 = vsel %vm229, %v1586, %v1588
      %v1605 = vsel %vm229, 0.0, %v1574
      %v1606 = vsel %vm247, %v1588, 0.0
      %v1608 = vrot.slane %v1605, 4
      %v1609 = vrot.slane %v1589, 4
      %v1610 = vrot.slane %v1590, 4
      %v1611 = vrot.slane %v1591, 4
      %v1612 = vrot.slane %v1592, 4
      %v1613 = vrot.slane %v1593, 4
      %v1614 = vrot.slane %v1594, 4
      %v1615 = vrot.slane %v1595, 4
      %1616 = vrot.lane.b32.xlu0 %v1608, 127
      %v1617 = vpop.permute.xlu0 %1616
      %1618 = vrot.lane.b32.xlu0 %v1609, 127
      %v1619 = vpop.permute.xlu0 %1618
      %1620 = vrot.lane.b32.xlu0 %v1610, 127
      %v1621 = vpop.permute.xlu0 %1620
      %1622 = vrot.lane.b32.xlu0 %v1611, 127
      %v1623 = vpop.permute.xlu0 %1622
      %1624 = vrot.lane.b32.xlu0 %v1612, 127
      %v1625 = vpop.permute.xlu0 %1624
      %1626 = vrot.lane.b32.xlu0 %v1613, 127
      %v1627 = vpop.permute.xlu0 %1626
      %1628 = vrot.lane.b32.xlu0 %v1614, 127
      %v1629 = vpop.permute.xlu0 %1628
      %1630 = vrot.lane.b32.xlu0 %v1615, 127
      %v1631 = vpop.permute.xlu0 %1630
      %v1632 = vsel %vm274, %v1617, %v1619
      %v1633 = vsel %vm274, %v1619, %v1621
      %v1634 = vsel %vm274, %v1621, %v1623
      %v1635 = vsel %vm274, %v1623, %v1625
      %v1636 = vsel %vm274, %v1625, %v1627
      %v1637 = vsel %vm274, %v1627, %v1629
      %v1638 = vsel %vm274, %v1629, %v1631
      %1647 = vrot.lane.b32.xlu0 %v1605, 126
      %v1648 = vpop.permute.xlu0 %1647
      %1649 = vrot.lane.b32.xlu0 %v1589, 126
      %v1650 = vpop.permute.xlu0 %1649
      %1651 = vrot.lane.b32.xlu0 %v1590, 126
      %v1652 = vpop.permute.xlu0 %1651
      %1653 = vrot.lane.b32.xlu0 %v1591, 126
      %v1654 = vpop.permute.xlu0 %1653
      %1655 = vrot.lane.b32.xlu0 %v1592, 126
      %v1656 = vpop.permute.xlu0 %1655
      %1657 = vrot.lane.b32.xlu0 %v1593, 126
      %v1658 = vpop.permute.xlu0 %1657
      %1659 = vrot.lane.b32.xlu0 %v1594, 126
      %v1660 = vpop.permute.xlu0 %1659
      %1661 = vrot.lane.b32.xlu0 %v1595, 126
      %v1662 = vpop.permute.xlu0 %1661
      %v1663 = vsel %vm306, %v1648, %v1650
      %v1664 = vsel %vm306, %v1650, %v1652
      %v1665 = vsel %vm306, %v1652, %v1654
      %v1666 = vsel %vm306, %v1654, %v1656
      %v1667 = vsel %vm306, %v1656, %v1658
      %v1668 = vsel %vm306, %v1658, %v1660
      %v1669 = vsel %vm306, %v1660, %v1662
      %1678 = vrot.lane.b32.xlu0 %v1608, 118
      %v1679 = vpop.permute.xlu0 %1678
      %1680 = vrot.lane.b32.xlu0 %v1609, 118
      %v1681 = vpop.permute.xlu0 %1680
      %1682 = vrot.lane.b32.xlu0 %v1610, 118
      %v1683 = vpop.permute.xlu0 %1682
      %1684 = vrot.lane.b32.xlu0 %v1611, 118
      %v1685 = vpop.permute.xlu0 %1684
      %1686 = vrot.lane.b32.xlu0 %v1612, 118
      %v1687 = vpop.permute.xlu0 %1686
      %1688 = vrot.lane.b32.xlu0 %v1613, 118
      %v1689 = vpop.permute.xlu0 %1688
      %1690 = vrot.lane.b32.xlu0 %v1614, 118
      %v1691 = vpop.permute.xlu0 %1690
      %1692 = vrot.lane.b32.xlu0 %v1615, 118
      %v1693 = vpop.permute.xlu0 %1692
      %v1694 = vsel %vm338, %v1679, %v1681
      %v1695 = vsel %vm338, %v1681, %v1683
      %v1696 = vsel %vm338, %v1683, %v1685
      %v1697 = vsel %vm338, %v1685, %v1687
      %v1698 = vsel %vm338, %v1687, %v1689
      %v1699 = vsel %vm338, %v1689, %v1691
      %v1700 = vsel %vm338, %v1691, %v1693
      %1709 = vrot.lane.b32.xlu0 %v1605, 117
      %v1710 = vpop.permute.xlu0 %1709
      %1711 = vrot.lane.b32.xlu0 %v1589, 117
      %v1712 = vpop.permute.xlu0 %1711
      %1713 = vrot.lane.b32.xlu0 %v1590, 117
      %v1714 = vpop.permute.xlu0 %1713
      %1715 = vrot.lane.b32.xlu0 %v1591, 117
      %v1716 = vpop.permute.xlu0 %1715
      %1717 = vrot.lane.b32.xlu0 %v1592, 117
      %v1718 = vpop.permute.xlu0 %1717
      %1719 = vrot.lane.b32.xlu0 %v1593, 117
      %v1720 = vpop.permute.xlu0 %1719
      %1721 = vrot.lane.b32.xlu0 %v1594, 117
      %v1722 = vpop.permute.xlu0 %1721
      %1723 = vrot.lane.b32.xlu0 %v1595, 117
      %v1724 = vpop.permute.xlu0 %1723
      %v1725 = vsel %vm370, %v1710, %v1712
      %v1726 = vsel %vm370, %v1712, %v1714
      %v1727 = vsel %vm370, %v1714, %v1716
      %v1728 = vsel %vm370, %v1716, %v1718
      %v1729 = vsel %vm370, %v1718, %v1720
      %v1730 = vsel %vm370, %v1720, %v1722
      %v1731 = vsel %vm370, %v1722, %v1724
      %1740 = vrot.lane.b32.xlu0 %v1608, 116
      %v1741 = vpop.permute.xlu0 %1740
      %1742 = vrot.lane.b32.xlu0 %v1609, 116
      %v1743 = vpop.permute.xlu0 %1742
      %1744 = vrot.lane.b32.xlu0 %v1610, 116
      %v1745 = vpop.permute.xlu0 %1744
      %1746 = vrot.lane.b32.xlu0 %v1611, 116
      %v1747 = vpop.permute.xlu0 %1746
      %1748 = vrot.lane.b32.xlu0 %v1612, 116
      %v1749 = vpop.permute.xlu0 %1748
      %1750 = vrot.lane.b32.xlu0 %v1613, 116
      %v1751 = vpop.permute.xlu0 %1750
      %1752 = vrot.lane.b32.xlu0 %v1614, 116
      %v1753 = vpop.permute.xlu0 %1752
      %1754 = vrot.lane.b32.xlu0 %v1615, 116
      %v1755 = vpop.permute.xlu0 %1754
      %v1756 = vsel %vm402, %v1741, %v1743
      %v1757 = vsel %vm402, %v1743, %v1745
      %v1758 = vsel %vm402, %v1745, %v1747
      %v1759 = vsel %vm402, %v1747, %v1749
      %v1760 = vsel %vm402, %v1749, %v1751
      %v1761 = vsel %vm402, %v1751, %v1753
      %v1762 = vsel %vm402, %v1753, %v1755
      %1771 = vrot.lane.b32.xlu0 %v1605, 108
      %v1772 = vpop.permute.xlu0 %1771
      %1773 = vrot.lane.b32.xlu0 %v1589, 108
      %v1774 = vpop.permute.xlu0 %1773
      %1775 = vrot.lane.b32.xlu0 %v1590, 108
      %v1776 = vpop.permute.xlu0 %1775
      %1777 = vrot.lane.b32.xlu0 %v1591, 108
      %v1778 = vpop.permute.xlu0 %1777
      %1779 = vrot.lane.b32.xlu0 %v1592, 108
      %v1780 = vpop.permute.xlu0 %1779
      %1781 = vrot.lane.b32.xlu0 %v1593, 108
      %v1782 = vpop.permute.xlu0 %1781
      %1783 = vrot.lane.b32.xlu0 %v1594, 108
      %v1784 = vpop.permute.xlu0 %1783
      %1785 = vrot.lane.b32.xlu0 %v1595, 108
      %v1786 = vpop.permute.xlu0 %1785
      %v1787 = vsel %vm434, %v1772, %v1774
      %v1788 = vsel %vm434, %v1774, %v1776
      %v1789 = vsel %vm434, %v1776, %v1778
      %v1790 = vsel %vm434, %v1778, %v1780
      %v1791 = vsel %vm434, %v1780, %v1782
      %v1792 = vsel %vm434, %v1782, %v1784
      %v1793 = vsel %vm434, %v1784, %v1786
      %1802 = vrot.lane.b32.xlu0 %v1608, 107
      %v1803 = vpop.permute.xlu0 %1802
      %1804 = vrot.lane.b32.xlu0 %v1609, 107
      %v1805 = vpop.permute.xlu0 %1804
      %1806 = vrot.lane.b32.xlu0 %v1610, 107
      %v1807 = vpop.permute.xlu0 %1806
      %1808 = vrot.lane.b32.xlu0 %v1611, 107
      %v1809 = vpop.permute.xlu0 %1808
      %1810 = vrot.lane.b32.xlu0 %v1612, 107
      %v1811 = vpop.permute.xlu0 %1810
      %1812 = vrot.lane.b32.xlu0 %v1613, 107
      %v1813 = vpop.permute.xlu0 %1812
      %1814 = vrot.lane.b32.xlu0 %v1614, 107
      %v1815 = vpop.permute.xlu0 %1814
      %1816 = vrot.lane.b32.xlu0 %v1615, 107
      %v1817 = vpop.permute.xlu0 %1816
      %v1818 = vsel %vm466, %v1803, %v1805
      %v1819 = vsel %vm466, %v1805, %v1807
      %v1820 = vsel %vm466, %v1807, %v1809
      %v1821 = vsel %vm466, %v1809, %v1811
      %v1822 = vsel %vm466, %v1811, %v1813
      %v1823 = vsel %vm466, %v1813, %v1815
      %v1824 = vsel %vm466, %v1815, %v1817
      %1833 = vrot.lane.b32.xlu0 %v1605, 106
      %v1834 = vpop.permute.xlu0 %1833
      %1835 = vrot.lane.b32.xlu0 %v1589, 106
      %v1836 = vpop.permute.xlu0 %1835
      %1837 = vrot.lane.b32.xlu0 %v1590, 106
      %v1838 = vpop.permute.xlu0 %1837
      %1839 = vrot.lane.b32.xlu0 %v1591, 106
      %v1840 = vpop.permute.xlu0 %1839
      %1841 = vrot.lane.b32.xlu0 %v1592, 106
      %v1842 = vpop.permute.xlu0 %1841
      %1843 = vrot.lane.b32.xlu0 %v1593, 106
      %v1844 = vpop.permute.xlu0 %1843
      %1845 = vrot.lane.b32.xlu0 %v1594, 106
      %v1846 = vpop.permute.xlu0 %1845
      %1847 = vrot.lane.b32.xlu0 %v1595, 106
      %v1848 = vpop.permute.xlu0 %1847
      %v1849 = vsel %vm498, %v1834, %v1836
      %v1850 = vsel %vm498, %v1836, %v1838
      %v1851 = vsel %vm498, %v1838, %v1840
      %v1852 = vsel %vm498, %v1840, %v1842
      %v1853 = vsel %vm498, %v1842, %v1844
      %v1854 = vsel %vm498, %v1844, %v1846
      %v1855 = vsel %vm498, %v1846, %v1848
      %v1864 = vsel %vm514, %v1605, %v1632
      %v1865 = vsel %vm514, %v1589, %v1633
      %v1866 = vsel %vm514, %v1590, %v1634
      %v1867 = vsel %vm514, %v1591, %v1635
      %v1868 = vsel %vm514, %v1592, %v1636
      %v1869 = vsel %vm514, %v1593, %v1637
      %v1870 = vsel %vm514, %v1594, %v1638
      %v1871 = vsel %vm514, %v1595, %v1631
      %v1872 = vsel %vm514, %v1663, %v1694
      %v1873 = vsel %vm514, %v1664, %v1695
      %v1874 = vsel %vm514, %v1665, %v1696
      %v1875 = vsel %vm514, %v1666, %v1697
      %v1876 = vsel %vm514, %v1667, %v1698
      %v1877 = vsel %vm514, %v1668, %v1699
      %v1878 = vsel %vm514, %v1669, %v1700
      %v1879 = vsel %vm514, %v1662, %v1693
      %v1880 = vsel %vm514, %v1725, %v1756
      %v1881 = vsel %vm514, %v1726, %v1757
      %v1882 = vsel %vm514, %v1727, %v1758
      %v1883 = vsel %vm514, %v1728, %v1759
      %v1884 = vsel %vm514, %v1729, %v1760
      %v1885 = vsel %vm514, %v1730, %v1761
      %v1886 = vsel %vm514, %v1731, %v1762
      %v1887 = vsel %vm514, %v1724, %v1755
      %v1888 = vsel %vm514, %v1787, %v1818
      %v1889 = vsel %vm514, %v1788, %v1819
      %v1890 = vsel %vm514, %v1789, %v1820
      %v1891 = vsel %vm514, %v1790, %v1821
      %v1892 = vsel %vm514, %v1791, %v1822
      %v1893 = vsel %vm514, %v1792, %v1823
      %v1894 = vsel %vm514, %v1793, %v1824
      %v1895 = vsel %vm514, %v1786, %v1817
      %v1896 = vpack.c.bf16 %v1872, %v1864
      %v1897 = vpack.c.bf16 %v1873, %v1865
      %v1898 = vpack.c.bf16 %v1874, %v1866
      %v1899 = vpack.c.bf16 %v1875, %v1867
      %v1900 = vpack.c.bf16 %v1876, %v1868
      %v1901 = vpack.c.bf16 %v1877, %v1869
      %v1902 = vpack.c.bf16 %v1878, %v1870
      %v1903 = vpack.c.bf16 %v1879, %v1871
      %v1904 = vpack.c.bf16 %v1888, %v1880
      %v1905 = vpack.c.bf16 %v1889, %v1881
      %v1906 = vpack.c.bf16 %v1890, %v1882
      %v1907 = vpack.c.bf16 %v1891, %v1883
      %v1908 = vpack.c.bf16 %v1892, %v1884
      %v1909 = vpack.c.bf16 %v1893, %v1885
      %v1910 = vpack.c.bf16 %v1894, %v1886
      %v1911 = vpack.c.bf16 %v1895, %v1887
      %v1912 = vpack.c.bf16 %v1849, %v1849
      %v1913 = vpack.c.bf16 %v1850, %v1850
      %v1914 = vpack.c.bf16 %v1851, %v1851
      %v1915 = vpack.c.bf16 %v1852, %v1852
      %v1916 = vpack.c.bf16 %v1853, %v1853
      %v1917 = vpack.c.bf16 %v1854, %v1854
      %v1918 = vpack.c.bf16 %v1855, %v1855
      %v1919 = vpack.c.bf16 %v1848, %v1848
      %s1920 = scalar_lea.vmem %s1, 6
      %v1921 = vld [vmem:[%s1920] sm:$0x3]
      %v1923 = vrot.slane %v1606, 4
      %1924 = vrot.lane.b32.xlu0 %v1923, 127
      %v1925 = vpop.permute.xlu0 %1924
      %v1926 = vsel %vm274, %v1631, %v1925
      %1929 = vrot.lane.b32.xlu0 %v1606, 126
      %v1930 = vpop.permute.xlu0 %1929
      %v1931 = vsel %vm306, %v1662, %v1930
      %1934 = vrot.lane.b32.xlu0 %v1923, 118
      %v1935 = vpop.permute.xlu0 %1934
      %v1936 = vsel %vm338, %v1693, %v1935
      %1939 = vrot.lane.b32.xlu0 %v1606, 117
      %v1940 = vpop.permute.xlu0 %1939
      %v1941 = vsel %vm370, %v1724, %v1940
      %1944 = vrot.lane.b32.xlu0 %v1923, 116
      %v1945 = vpop.permute.xlu0 %1944
      %v1946 = vsel %vm402, %v1755, %v1945
      %1949 = vrot.lane.b32.xlu0 %v1606, 108
      %v1950 = vpop.permute.xlu0 %1949
      %v1951 = vsel %vm434, %v1786, %v1950
      %1954 = vrot.lane.b32.xlu0 %v1923, 107
      %v1955 = vpop.permute.xlu0 %1954
      %v1956 = vsel %vm466, %v1817, %v1955
      %1959 = vrot.lane.b32.xlu0 %v1606, 106
      %v1960 = vpop.permute.xlu0 %1959
      %v1961 = vsel %vm498, %v1848, %v1960
      %v1964 = vsel %vm514, %v1595, %v1926
      %v1965 = vsel %vm514, %v1606, %v1925
      %v1966 = vsel %vm514, %v1931, %v1936
      %v1967 = vsel %vm514, %v1930, %v1935
      %v1968 = vsel %vm514, %v1941, %v1946
      %v1969 = vsel %vm514, %v1940, %v1945
      %v1970 = vsel %vm514, %v1951, %v1956
      %v1971 = vsel %vm514, %v1950, %v1955
      %v1972 = vpack.c.bf16 %v1966, %v1964
      %v1973 = vpack.c.bf16 %v1967, %v1965
      %v1974 = vpack.c.bf16 %v1970, %v1968
      %v1975 = vpack.c.bf16 %v1971, %v1969
      %v1976 = vpack.c.bf16 %v1961, %v1961
      %v1977 = vpack.c.bf16 %v1960, %v1960
      %s1978 = scalar_lea.vmem %s1, 8
      %v1979 = vld [vmem:[%s1978] sm:$0x3]
      %2007 = vrot.lane.b32.xlu0 %v1896, 28
      %v2008 = vpop.permute.xlu0 %2007
      %2009 = vrot.lane.b32.xlu0 %v1897, 28
      %v2010 = vpop.permute.xlu0 %2009
      %2011 = vrot.lane.b32.xlu0 %v1898, 28
      %v2012 = vpop.permute.xlu0 %2011
      %2013 = vrot.lane.b32.xlu0 %v1899, 28
      %v2014 = vpop.permute.xlu0 %2013
      %2015 = vrot.lane.b32.xlu0 %v1900, 28
      %v2016 = vpop.permute.xlu0 %2015
      %2017 = vrot.lane.b32.xlu0 %v1901, 28
      %v2018 = vpop.permute.xlu0 %2017
      %2019 = vrot.lane.b32.xlu0 %v1902, 28
      %v2020 = vpop.permute.xlu0 %2019
      %2021 = vrot.lane.b32.xlu0 %v1972, 28
      %v2022 = vpop.permute.xlu0 %2021
      %2023 = vrot.lane.b32.xlu0 %v1973, 28
      %v2024 = vpop.permute.xlu0 %2023
      %2025 = vrot.lane.b32.xlu0 %v1904, 28
      %v2026 = vpop.permute.xlu0 %2025
      %2027 = vrot.lane.b32.xlu0 %v1905, 28
      %v2028 = vpop.permute.xlu0 %2027
      %2029 = vrot.lane.b32.xlu0 %v1906, 28
      %v2030 = vpop.permute.xlu0 %2029
      %2031 = vrot.lane.b32.xlu0 %v1907, 28
      %v2032 = vpop.permute.xlu0 %2031
      %2033 = vrot.lane.b32.xlu0 %v1908, 28
      %v2034 = vpop.permute.xlu0 %2033
      %2035 = vrot.lane.b32.xlu0 %v1909, 28
      %v2036 = vpop.permute.xlu0 %2035
      %2037 = vrot.lane.b32.xlu0 %v1910, 28
      %v2038 = vpop.permute.xlu0 %2037
      %2039 = vrot.lane.b32.xlu0 %v1974, 28
      %v2040 = vpop.permute.xlu0 %2039
      %2041 = vrot.lane.b32.xlu0 %v1975, 28
      %v2042 = vpop.permute.xlu0 %2041
      %2043 = vrot.lane.b32.xlu0 %v1912, 28
      %v2044 = vpop.permute.xlu0 %2043
      %2045 = vrot.lane.b32.xlu0 %v1913, 28
      %v2046 = vpop.permute.xlu0 %2045
      %2047 = vrot.lane.b32.xlu0 %v1914, 28
      %v2048 = vpop.permute.xlu0 %2047
      %2049 = vrot.lane.b32.xlu0 %v1915, 28
      %v2050 = vpop.permute.xlu0 %2049
      %2051 = vrot.lane.b32.xlu0 %v1916, 28
      %v2052 = vpop.permute.xlu0 %2051
      %2053 = vrot.lane.b32.xlu0 %v1917, 28
      %v2054 = vpop.permute.xlu0 %2053
      %2055 = vrot.lane.b32.xlu0 %v1918, 28
      %v2056 = vpop.permute.xlu0 %2055
      %2057 = vrot.lane.b32.xlu0 %v1976, 28
      %v2058 = vpop.permute.xlu0 %2057
      %2059 = vrot.lane.b32.xlu0 %v1977, 28
      %v2060 = vpop.permute.xlu0 %2059
      %v2061 = vsel %vm711, %v2008, %v2010
      %v2062 = vsel %vm711, %v2010, %v2012
      %v2063 = vsel %vm711, %v2012, %v2014
      %v2064 = vsel %vm711, %v2014, %v2016
      %v2065 = vsel %vm711, %v2016, %v2018
      %v2066 = vsel %vm711, %v2018, %v2020
      %v2067 = vsel %vm711, %v2020, %v2022
      %v2068 = vsel %vm711, %v2022, %v2024
      %v2069 = vsel %vm711, %v2026, %v2028
      %v2070 = vsel %vm711, %v2028, %v2030
      %v2071 = vsel %vm711, %v2030, %v2032
      %v2072 = vsel %vm711, %v2032, %v2034
      %v2073 = vsel %vm711, %v2034, %v2036
      %v2074 = vsel %vm711, %v2036, %v2038
      %v2075 = vsel %vm711, %v2038, %v2040
      %v2076 = vsel %vm711, %v2040, %v2042
      %v2077 = vsel %vm711, %v2044, %v2046
      %v2078 = vsel %vm711, %v2046, %v2048
      %v2079 = vsel %vm711, %v2048, %v2050
      %v2080 = vsel %vm711, %v2050, %v2052
      %v2081 = vsel %vm711, %v2052, %v2054
      %v2082 = vsel %vm711, %v2054, %v2056
      %v2083 = vsel %vm711, %v2056, %v2058
      %v2084 = vsel %vm711, %v2058, %v2060
      %v2102 = vsel %vm752, %v1979, 0
      %v2105 = vsel %vm756, %v2077, 0
      %v2108 = vsel %vm756, %v2078, 0
      %v2111 = vsel %vm756, %v2079, 0
      %v2114 = vsel %vm756, %v2080, 0
      %v2117 = vsel %vm756, %v2081, 0
      %v2120 = vsel %vm756, %v2082, 0
      %v2123 = vsel %vm756, %v2083, 0
      %v2126 = vsel %vm756, %v2084, 0
      %2128 = vmatprep.subr.bf16.mxu0 0
      %2129 = vmatpush1.bf16.msra.mxu0 0
      %2130 = vmatprep.subr.bf16.mxu0 0
      %2131 = vmatpush1.bf16.msra.mxu0 0
      %2132 = vmatprep.subr.bf16.mxu0 0
      %2133 = vmatpush1.bf16.msra.mxu0 0
      %2134 = vmatprep.subr.bf16.mxu0 0
      %2135 = vmatpush1.bf16.msra.mxu0 0
      %2136 = vmatprep.subr.bf16.mxu0 0
      %2137 = vmatpush1.bf16.msra.mxu0 0
      %2138 = vmatprep.subr.bf16.mxu0 %v2108
      %2139 = vmatpush1.bf16.msra.mxu0 %v2105
      %2140 = vmatprep.subr.bf16.mxu0 %v2070
      %2141 = vmatpush1.bf16.msra.mxu0 %v2069
      %2142 = vmatprep.subr.bf16.mxu0 %v2062
      %2143 = vmatpush1.bf16.msra.mxu0 %v2061
      %2144 = vmatprep.subr.bf16.mxu0 0
      %2145 = vmatpush2.bf16.msra.mxu0 0
      %2146 = vmatprep.subr.bf16.mxu0 0
      %2147 = vmatpush2.bf16.msra.mxu0 0
      %2148 = vmatprep.subr.bf16.mxu0 0
      %2149 = vmatpush2.bf16.msra.mxu0 0
      %2150 = vmatprep.subr.bf16.mxu0 0
      %2151 = vmatpush2.bf16.msra.mxu0 0
      %2152 = vmatprep.subr.bf16.mxu0 0
      %2153 = vmatpush2.bf16.msra.mxu0 0
      %2154 = vmatprep.subr.bf16.mxu0 0
      %2155 = vmatpush2.bf16.msra.mxu0 0
      %2156 = vmatprep.subr.bf16.mxu0 0
      %2157 = vmatpush2.bf16.msra.mxu0 0
      %2158 = vmatprep.subr.bf16.mxu0 0
      %2159 = vmatpush2.bf16.msra.mxu0 0
      %2160 = vmatprep.mubr.bf16.mxu0 0
      %2161 = vmatmul.mubr.bf16.gmra.mxu0 %v2102
      %v2162 = vpop.f32.mrf.mxu0
      %v2163 = vadd.f32 0.0, %v2162
      %v2164 = vpop.f32.mrf.mxu0
      %v2165 = vadd.f32 0.0, %v2164
      %v2166 = vpop.f32.mrf.mxu0
      %v2167 = vpop.f32.mrf.mxu0
      %2168 = vdwg.mxu0
      %2169 = vmatprep.subr.bf16.mxu0 0
      %2170 = vmatpush1.bf16.msra.mxu0 0
      %2171 = vmatprep.subr.bf16.mxu0 0
      %2172 = vmatpush1.bf16.msra.mxu0 0
      %2173 = vmatprep.subr.bf16.mxu0 0
      %2174 = vmatpush1.bf16.msra.mxu0 0
      %2175 = vmatprep.subr.bf16.mxu0 0
      %2176 = vmatpush1.bf16.msra.mxu0 0
      %2177 = vmatprep.subr.bf16.mxu0 0
      %2178 = vmatpush1.bf16.msra.mxu0 0
      %2179 = vmatprep.subr.bf16.mxu0 %v2114
      %2180 = vmatpush1.bf16.msra.mxu0 %v2111
      %2181 = vmatprep.subr.bf16.mxu0 %v2072
      %2182 = vmatpush1.bf16.msra.mxu0 %v2071
      %2183 = vmatprep.subr.bf16.mxu0 %v2064
      %2184 = vmatpush1.bf16.msra.mxu0 %v2063
      %2185 = vmatprep.subr.bf16.mxu0 0
      %2186 = vmatpush2.bf16.msra.mxu0 0
      %2187 = vmatprep.subr.bf16.mxu0 0
      %2188 = vmatpush2.bf16.msra.mxu0 0
      %2189 = vmatprep.subr.bf16.mxu0 0
      %2190 = vmatpush2.bf16.msra.mxu0 0
      %2191 = vmatprep.subr.bf16.mxu0 0
      %2192 = vmatpush2.bf16.msra.mxu0 0
      %2193 = vmatprep.subr.bf16.mxu0 0
      %2194 = vmatpush2.bf16.msra.mxu0 0
      %2195 = vmatprep.subr.bf16.mxu0 0
      %2196 = vmatpush2.bf16.msra.mxu0 0
      %2197 = vmatprep.subr.bf16.mxu0 0
      %2198 = vmatpush2.bf16.msra.mxu0 0
      %2199 = vmatprep.subr.bf16.mxu0 0
      %2200 = vmatpush2.bf16.msra.mxu0 0
      %2201 = vmatprep.mubr.bf16.mxu0 0
      %2202 = vmatmul.mubr.bf16.gmra.mxu0 %v2102
      %v2203 = vpop.f32.mrf.mxu0
      %v2204 = vadd.f32 0.0, %v2203
      %v2205 = vpop.f32.mrf.mxu0
      %v2206 = vadd.f32 0.0, %v2205
      %v2207 = vpop.f32.mrf.mxu0
      %v2208 = vpop.f32.mrf.mxu0
      %2209 = vdwg.mxu0
      %2210 = vmatprep.subr.bf16.mxu0 0
      %2211 = vmatpush1.bf16.msra.mxu0 0
      %2212 = vmatprep.subr.bf16.mxu0 0
      %2213 = vmatpush1.bf16.msra.mxu0 0
      %2214 = vmatprep.subr.bf16.mxu0 0
      %2215 = vmatpush1.bf16.msra.mxu0 0
      %2216 = vmatprep.subr.bf16.mxu0 0
      %2217 = vmatpush1.bf16.msra.mxu0 0
      %2218 = vmatprep.subr.bf16.mxu0 0
      %2219 = vmatpush1.bf16.msra.mxu0 0
      %2220 = vmatprep.subr.bf16.mxu0 %v2120
      %2221 = vmatpush1.bf16.msra.mxu0 %v2117
      %2222 = vmatprep.subr.bf16.mxu0 %v2074
      %2223 = vmatpush1.bf16.msra.mxu0 %v2073
      %2224 = vmatprep.subr.bf16.mxu0 %v2066
      %2225 = vmatpush1.bf16.msra.mxu0 %v2065
      %2226 = vmatprep.subr.bf16.mxu0 0
      %2227 = vmatpush2.bf16.msra.mxu0 0
      %2228 = vmatprep.subr.bf16.mxu0 0
      %2229 = vmatpush2.bf16.msra.mxu0 0
      %2230 = vmatprep.subr.bf16.mxu0 0
      %2231 = vmatpush2.bf16.msra.mxu0 0
      %2232 = vmatprep.subr.bf16.mxu0 0
      %2233 = vmatpush2.bf16.msra.mxu0 0
      %2234 = vmatprep.subr.bf16.mxu0 0
      %2235 = vmatpush2.bf16.msra.mxu0 0
      %2236 = vmatprep.subr.bf16.mxu0 0
      %2237 = vmatpush2.bf16.msra.mxu0 0
      %2238 = vmatprep.subr.bf16.mxu0 0
      %2239 = vmatpush2.bf16.msra.mxu0 0
      %2240 = vmatprep.subr.bf16.mxu0 0
      %2241 = vmatpush2.bf16.msra.mxu0 0
      %2242 = vmatprep.mubr.bf16.mxu0 0
      %2243 = vmatmul.mubr.bf16.gmra.mxu0 %v2102
      %v2244 = vpop.f32.mrf.mxu0
      %v2245 = vadd.f32 0.0, %v2244
      %v2246 = vpop.f32.mrf.mxu0
      %v2247 = vadd.f32 0.0, %v2246
      %v2248 = vpop.f32.mrf.mxu0
      %v2249 = vpop.f32.mrf.mxu0
      %2250 = vdwg.mxu0
      %2251 = vmatprep.subr.bf16.mxu0 0
      %2252 = vmatpush1.bf16.msra.mxu0 0
      %2253 = vmatprep.subr.bf16.mxu0 0
      %2254 = vmatpush1.bf16.msra.mxu0 0
      %2255 = vmatprep.subr.bf16.mxu0 0
      %2256 = vmatpush1.bf16.msra.mxu0 0
      %2257 = vmatprep.subr.bf16.mxu0 0
      %2258 = vmatpush1.bf16.msra.mxu0 0
      %2259 = vmatprep.subr.bf16.mxu0 0
      %2260 = vmatpush1.bf16.msra.mxu0 0
      %2261 = vmatprep.subr.bf16.mxu0 %v2126
      %2262 = vmatpush1.bf16.msra.mxu0 %v2123
      %2263 = vmatprep.subr.bf16.mxu0 %v2076
      %2264 = vmatpush1.bf16.msra.mxu0 %v2075
      %2265 = vmatprep.subr.bf16.mxu0 %v2068
      %2266 = vmatpush1.bf16.msra.mxu0 %v2067
      %2267 = vmatprep.subr.bf16.mxu0 0
      %2268 = vmatpush2.bf16.msra.mxu0 0
      %2269 = vmatprep.subr.bf16.mxu0 0
      %2270 = vmatpush2.bf16.msra.mxu0 0
      %2271 = vmatprep.subr.bf16.mxu0 0
      %2272 = vmatpush2.bf16.msra.mxu0 0
      %2273 = vmatprep.subr.bf16.mxu0 0
      %2274 = vmatpush2.bf16.msra.mxu0 0
      %2275 = vmatprep.subr.bf16.mxu0 0
      %2276 = vmatpush2.bf16.msra.mxu0 0
      %2277 = vmatprep.subr.bf16.mxu0 0
      %2278 = vmatpush2.bf16.msra.mxu0 0
      %2279 = vmatprep.subr.bf16.mxu0 0
      %2280 = vmatpush2.bf16.msra.mxu0 0
      %2281 = vmatprep.subr.bf16.mxu0 0
      %2282 = vmatpush2.bf16.msra.mxu0 0
      %2283 = vmatprep.mubr.bf16.mxu0 0
      %2284 = vmatmul.mubr.bf16.gmra.mxu0 %v2102
      %v2285 = vpop.f32.mrf.mxu0
      %v2286 = vadd.f32 0.0, %v2285
      %v2287 = vpop.f32.mrf.mxu0
      %v2288 = vadd.f32 0.0, %v2287
      %v2289 = vpop.f32.mrf.mxu0
      %v2290 = vpop.f32.mrf.mxu0
      %2291 = vdwg.mxu0
      %v2293 = vsel %vm752, %v1921, 0
      %v2296 = vsel %vm756, %v1912, 0
      %v2299 = vsel %vm756, %v1913, 0
      %v2302 = vsel %vm756, %v1914, 0
      %v2305 = vsel %vm756, %v1915, 0
      %v2308 = vsel %vm756, %v1916, 0
      %v2311 = vsel %vm756, %v1917, 0
      %v2314 = vsel %vm756, %v1918, 0
      %v2317 = vsel %vm756, %v1919, 0
      %2319 = vmatprep.subr.bf16.mxu0 0
      %2320 = vmatpush1.bf16.msra.mxu0 0
      %2321 = vmatprep.subr.bf16.mxu0 0
      %2322 = vmatpush1.bf16.msra.mxu0 0
      %2323 = vmatprep.subr.bf16.mxu0 0
      %2324 = vmatpush1.bf16.msra.mxu0 0
      %2325 = vmatprep.subr.bf16.mxu0 0
      %2326 = vmatpush1.bf16.msra.mxu0 0
      %2327 = vmatprep.subr.bf16.mxu0 0
      %2328 = vmatpush1.bf16.msra.mxu0 0
      %2329 = vmatprep.subr.bf16.mxu0 %v2299
      %2330 = vmatpush1.bf16.msra.mxu0 %v2296
      %2331 = vmatprep.subr.bf16.mxu0 %v1905
      %2332 = vmatpush1.bf16.msra.mxu0 %v1904
      %2333 = vmatprep.subr.bf16.mxu0 %v1897
      %2334 = vmatpush1.bf16.msra.mxu0 %v1896
      %2335 = vmatprep.subr.bf16.mxu0 0
      %2336 = vmatpush2.bf16.msra.mxu0 0
      %2337 = vmatprep.subr.bf16.mxu0 0
      %2338 = vmatpush2.bf16.msra.mxu0 0
      %2339 = vmatprep.subr.bf16.mxu0 0
      %2340 = vmatpush2.bf16.msra.mxu0 0
      %2341 = vmatprep.subr.bf16.mxu0 0
      %2342 = vmatpush2.bf16.msra.mxu0 0
      %2343 = vmatprep.subr.bf16.mxu0 0
      %2344 = vmatpush2.bf16.msra.mxu0 0
      %2345 = vmatprep.subr.bf16.mxu0 0
      %2346 = vmatpush2.bf16.msra.mxu0 0
      %2347 = vmatprep.subr.bf16.mxu0 0
      %2348 = vmatpush2.bf16.msra.mxu0 0
      %2349 = vmatprep.subr.bf16.mxu0 0
      %2350 = vmatpush2.bf16.msra.mxu0 0
      %2351 = vmatprep.mubr.bf16.mxu0 0
      %2352 = vmatmul.mubr.bf16.gmra.mxu0 %v2293
      %v2353 = vpop.f32.mrf.mxu0
      %v2354 = vadd.f32 %v2163, %v2353
      %v2355 = vpop.f32.mrf.mxu0
      %v2356 = vadd.f32 %v2165, %v2355
      %v2357 = vpop.f32.mrf.mxu0
      %v2358 = vpop.f32.mrf.mxu0
      %2359 = vdwg.mxu0
      %2360 = vmatprep.subr.bf16.mxu0 0
      %2361 = vmatpush1.bf16.msra.mxu0 0
      %2362 = vmatprep.subr.bf16.mxu0 0
      %2363 = vmatpush1.bf16.msra.mxu0 0
      %2364 = vmatprep.subr.bf16.mxu0 0
      %2365 = vmatpush1.bf16.msra.mxu0 0
      %2366 = vmatprep.subr.bf16.mxu0 0
      %2367 = vmatpush1.bf16.msra.mxu0 0
      %2368 = vmatprep.subr.bf16.mxu0 0
      %2369 = vmatpush1.bf16.msra.mxu0 0
      %2370 = vmatprep.subr.bf16.mxu0 %v2305
      %2371 = vmatpush1.bf16.msra.mxu0 %v2302
      %2372 = vmatprep.subr.bf16.mxu0 %v1907
      %2373 = vmatpush1.bf16.msra.mxu0 %v1906
      %2374 = vmatprep.subr.bf16.mxu0 %v1899
      %2375 = vmatpush1.bf16.msra.mxu0 %v1898
      %2376 = vmatprep.subr.bf16.mxu0 0
      %2377 = vmatpush2.bf16.msra.mxu0 0
      %2378 = vmatprep.subr.bf16.mxu0 0
      %2379 = vmatpush2.bf16.msra.mxu0 0
      %2380 = vmatprep.subr.bf16.mxu0 0
      %2381 = vmatpush2.bf16.msra.mxu0 0
      %2382 = vmatprep.subr.bf16.mxu0 0
      %2383 = vmatpush2.bf16.msra.mxu0 0
      %2384 = vmatprep.subr.bf16.mxu0 0
      %2385 = vmatpush2.bf16.msra.mxu0 0
      %2386 = vmatprep.subr.bf16.mxu0 0
      %2387 = vmatpush2.bf16.msra.mxu0 0
      %2388 = vmatprep.subr.bf16.mxu0 0
      %2389 = vmatpush2.bf16.msra.mxu0 0
      %2390 = vmatprep.subr.bf16.mxu0 0
      %2391 = vmatpush2.bf16.msra.mxu0 0
      %2392 = vmatprep.mubr.bf16.mxu0 0
      %2393 = vmatmul.mubr.bf16.gmra.mxu0 %v2293
      %v2394 = vpop.f32.mrf.mxu0
      %v2395 = vadd.f32 %v2204, %v2394
      %v2396 = vpop.f32.mrf.mxu0
      %v2397 = vadd.f32 %v2206, %v2396
      %v2398 = vpop.f32.mrf.mxu0
      %v2399 = vpop.f32.mrf.mxu0
      %2400 = vdwg.mxu0
      %2401 = vmatprep.subr.bf16.mxu0 0
      %2402 = vmatpush1.bf16.msra.mxu0 0
      %2403 = vmatprep.subr.bf16.mxu0 0
      %2404 = vmatpush1.bf16.msra.mxu0 0
      %2405 = vmatprep.subr.bf16.mxu0 0
      %2406 = vmatpush1.bf16.msra.mxu0 0
      %2407 = vmatprep.subr.bf16.mxu0 0
      %2408 = vmatpush1.bf16.msra.mxu0 0
      %2409 = vmatprep.subr.bf16.mxu0 0
      %2410 = vmatpush1.bf16.msra.mxu0 0
      %2411 = vmatprep.subr.bf16.mxu0 %v2311
      %2412 = vmatpush1.bf16.msra.mxu0 %v2308
      %2413 = vmatprep.subr.bf16.mxu0 %v1909
      %2414 = vmatpush1.bf16.msra.mxu0 %v1908
      %2415 = vmatprep.subr.bf16.mxu0 %v1901
      %2416 = vmatpush1.bf16.msra.mxu0 %v1900
      %2417 = vmatprep.subr.bf16.mxu0 0
      %2418 = vmatpush2.bf16.msra.mxu0 0
      %2419 = vmatprep.subr.bf16.mxu0 0
      %2420 = vmatpush2.bf16.msra.mxu0 0
      %2421 = vmatprep.subr.bf16.mxu0 0
      %2422 = vmatpush2.bf16.msra.mxu0 0
      %2423 = vmatprep.subr.bf16.mxu0 0
      %2424 = vmatpush2.bf16.msra.mxu0 0
      %2425 = vmatprep.subr.bf16.mxu0 0
      %2426 = vmatpush2.bf16.msra.mxu0 0
      %2427 = vmatprep.subr.bf16.mxu0 0
      %2428 = vmatpush2.bf16.msra.mxu0 0
      %2429 = vmatprep.subr.bf16.mxu0 0
      %2430 = vmatpush2.bf16.msra.mxu0 0
      %2431 = vmatprep.subr.bf16.mxu0 0
      %2432 = vmatpush2.bf16.msra.mxu0 0
      %2433 = vmatprep.mubr.bf16.mxu0 0
      %2434 = vmatmul.mubr.bf16.gmra.mxu0 %v2293
      %v2435 = vpop.f32.mrf.mxu0
      %v2436 = vadd.f32 %v2245, %v2435
      %v2437 = vpop.f32.mrf.mxu0
      %v2438 = vadd.f32 %v2247, %v2437
      %v2439 = vpop.f32.mrf.mxu0
      %v2440 = vpop.f32.mrf.mxu0
      %2441 = vdwg.mxu0
      %2442 = vmatprep.subr.bf16.mxu0 0
      %2443 = vmatpush1.bf16.msra.mxu0 0
      %2444 = vmatprep.subr.bf16.mxu0 0
      %2445 = vmatpush1.bf16.msra.mxu0 0
      %2446 = vmatprep.subr.bf16.mxu0 0
      %2447 = vmatpush1.bf16.msra.mxu0 0
      %2448 = vmatprep.subr.bf16.mxu0 0
      %2449 = vmatpush1.bf16.msra.mxu0 0
      %2450 = vmatprep.subr.bf16.mxu0 0
      %2451 = vmatpush1.bf16.msra.mxu0 0
      %2452 = vmatprep.subr.bf16.mxu0 %v2317
      %2453 = vmatpush1.bf16.msra.mxu0 %v2314
      %2454 = vmatprep.subr.bf16.mxu0 %v1911
      %2455 = vmatpush1.bf16.msra.mxu0 %v1910
      %2456 = vmatprep.subr.bf16.mxu0 %v1903
      %2457 = vmatpush1.bf16.msra.mxu0 %v1902
      %2458 = vmatprep.subr.bf16.mxu0 0
      %2459 = vmatpush2.bf16.msra.mxu0 0
      %2460 = vmatprep.subr.bf16.mxu0 0
      %2461 = vmatpush2.bf16.msra.mxu0 0
      %2462 = vmatprep.subr.bf16.mxu0 0
      %2463 = vmatpush2.bf16.msra.mxu0 0
      %2464 = vmatprep.subr.bf16.mxu0 0
      %2465 = vmatpush2.bf16.msra.mxu0 0
      %2466 = vmatprep.subr.bf16.mxu0 0
      %2467 = vmatpush2.bf16.msra.mxu0 0
      %2468 = vmatprep.subr.bf16.mxu0 0
      %2469 = vmatpush2.bf16.msra.mxu0 0
      %2470 = vmatprep.subr.bf16.mxu0 0
      %2471 = vmatpush2.bf16.msra.mxu0 0
      %2472 = vmatprep.subr.bf16.mxu0 0
      %2473 = vmatpush2.bf16.msra.mxu0 0
      %2474 = vmatprep.mubr.bf16.mxu0 0
      %2475 = vmatmul.mubr.bf16.gmra.mxu0 %v2293
      %v2476 = vpop.f32.mrf.mxu0
      %v2477 = vadd.f32 %v2286, %v2476
      %v2478 = vpop.f32.mrf.mxu0
      %v2479 = vadd.f32 %v2288, %v2478
      %v2480 = vpop.f32.mrf.mxu0
      %v2481 = vpop.f32.mrf.mxu0
      %2482 = vdwg.mxu0
      %v2483 = vsel %vm274, %v1925, %v1139
      %v2485 = vsel %vm306, %v1930, %v1144
      %v2487 = vsel %vm338, %v1935, %v1149
      %v2489 = vsel %vm370, %v1940, %v1154
      %v2491 = vsel %vm402, %v1945, %v1159
      %v2493 = vsel %vm434, %v1950, %v1164
      %v2495 = vsel %vm466, %v1955, %v1169
      %v2497 = vsel %vm498, %v1960, %v1174
      %v2499 = vsel %vm514, %v1606, %v2483
      %v2500 = vsel %vm514, %v2485, %v2487
      %v2501 = vsel %vm514, %v2489, %v2491
      %v2502 = vsel %vm514, %v2493, %v2495
      %v2503 = vpack.c.bf16 %v2500, %v2499
      %v2504 = vpack.c.bf16 %v2502, %v2501
      %v2505 = vpack.c.bf16 %v2497, %v2497
      %s2506 = scalar_lea.vmem %s1, 10
      %v2507 = vld [vmem:[%s2506] sm:$0x3]
      %2511 = vrot.lane.b32.xlu0 %v1897, 56
      %v2512 = vpop.permute.xlu0 %2511
      %2513 = vrot.lane.b32.xlu0 %v1898, 56
      %v2514 = vpop.permute.xlu0 %2513
      %2515 = vrot.lane.b32.xlu0 %v1899, 56
      %v2516 = vpop.permute.xlu0 %2515
      %2517 = vrot.lane.b32.xlu0 %v1900, 56
      %v2518 = vpop.permute.xlu0 %2517
      %2519 = vrot.lane.b32.xlu0 %v1901, 56
      %v2520 = vpop.permute.xlu0 %2519
      %2521 = vrot.lane.b32.xlu0 %v1902, 56
      %v2522 = vpop.permute.xlu0 %2521
      %2523 = vrot.lane.b32.xlu0 %v1972, 56
      %v2524 = vpop.permute.xlu0 %2523
      %2525 = vrot.lane.b32.xlu0 %v2503, 56
      %v2526 = vpop.permute.xlu0 %2525
      %2527 = vrot.lane.b32.xlu0 %v1905, 56
      %v2528 = vpop.permute.xlu0 %2527
      %2529 = vrot.lane.b32.xlu0 %v1906, 56
      %v2530 = vpop.permute.xlu0 %2529
      %2531 = vrot.lane.b32.xlu0 %v1907, 56
      %v2532 = vpop.permute.xlu0 %2531
      %2533 = vrot.lane.b32.xlu0 %v1908, 56
      %v2534 = vpop.permute.xlu0 %2533
      %2535 = vrot.lane.b32.xlu0 %v1909, 56
      %v2536 = vpop.permute.xlu0 %2535
      %2537 = vrot.lane.b32.xlu0 %v1910, 56
      %v2538 = vpop.permute.xlu0 %2537
      %2539 = vrot.lane.b32.xlu0 %v1974, 56
      %v2540 = vpop.permute.xlu0 %2539
      %2541 = vrot.lane.b32.xlu0 %v2504, 56
      %v2542 = vpop.permute.xlu0 %2541
      %2543 = vrot.lane.b32.xlu0 %v1913, 56
      %v2544 = vpop.permute.xlu0 %2543
      %2545 = vrot.lane.b32.xlu0 %v1914, 56
      %v2546 = vpop.permute.xlu0 %2545
      %2547 = vrot.lane.b32.xlu0 %v1915, 56
      %v2548 = vpop.permute.xlu0 %2547
      %2549 = vrot.lane.b32.xlu0 %v1916, 56
      %v2550 = vpop.permute.xlu0 %2549
      %2551 = vrot.lane.b32.xlu0 %v1917, 56
      %v2552 = vpop.permute.xlu0 %2551
      %2553 = vrot.lane.b32.xlu0 %v1918, 56
      %v2554 = vpop.permute.xlu0 %2553
      %2555 = vrot.lane.b32.xlu0 %v1976, 56
      %v2556 = vpop.permute.xlu0 %2555
      %2557 = vrot.lane.b32.xlu0 %v2505, 56
      %v2558 = vpop.permute.xlu0 %2557
      %v2559 = vsel %vm1254, %v2512, %v2514
      %v2560 = vsel %vm1254, %v2514, %v2516
      %v2561 = vsel %vm1254, %v2516, %v2518
      %v2562 = vsel %vm1254, %v2518, %v2520
      %v2563 = vsel %vm1254, %v2520, %v2522
      %v2564 = vsel %vm1254, %v2522, %v2524
      %v2565 = vsel %vm1254, %v2524, %v2526
      %v2566 = vsel %vm1254, %v2526, %v1217
      %v2567 = vsel %vm1254, %v2528, %v2530
      %v2568 = vsel %vm1254, %v2530, %v2532
      %v2569 = vsel %vm1254, %v2532, %v2534
      %v2570 = vsel %vm1254, %v2534, %v2536
      %v2571 = vsel %vm1254, %v2536, %v2538
      %v2572 = vsel %vm1254, %v2538, %v2540
      %v2573 = vsel %vm1254, %v2540, %v2542
      %v2574 = vsel %vm1254, %v2542, %v1235
      %v2575 = vsel %vm1254, %v2544, %v2546
      %v2576 = vsel %vm1254, %v2546, %v2548
      %v2577 = vsel %vm1254, %v2548, %v2550
      %v2578 = vsel %vm1254, %v2550, %v2552
      %v2579 = vsel %vm1254, %v2552, %v2554
      %v2580 = vsel %vm1254, %v2554, %v2556
      %v2581 = vsel %vm1254, %v2556, %v2558
      %v2582 = vsel %vm1254, %v2558, %v1253
      %v2600 = vsel %vm752, %v2507, 0
      %v2603 = vsel %vm756, %v2575, 0
      %v2606 = vsel %vm756, %v2576, 0
      %v2609 = vsel %vm756, %v2577, 0
      %v2612 = vsel %vm756, %v2578, 0
      %v2615 = vsel %vm756, %v2579, 0
      %v2618 = vsel %vm756, %v2580, 0
      %v2621 = vsel %vm756, %v2581, 0
      %v2624 = vsel %vm756, %v2582, 0
      %2626 = vmatprep.subr.bf16.mxu0 0
      %2627 = vmatpush1.bf16.msra.mxu0 0
      %2628 = vmatprep.subr.bf16.mxu0 0
      %2629 = vmatpush1.bf16.msra.mxu0 0
      %2630 = vmatprep.subr.bf16.mxu0 0
      %2631 = vmatpush1.bf16.msra.mxu0 0
      %2632 = vmatprep.subr.bf16.mxu0 0
      %2633 = vmatpush1.bf16.msra.mxu0 0
      %2634 = vmatprep.subr.bf16.mxu0 0
      %2635 = vmatpush1.bf16.msra.mxu0 0
      %2636 = vmatprep.subr.bf16.mxu0 %v2606
      %2637 = vmatpush1.bf16.msra.mxu0 %v2603
      %2638 = vmatprep.subr.bf16.mxu0 %v2568
      %2639 = vmatpush1.bf16.msra.mxu0 %v2567
      %2640 = vmatprep.subr.bf16.mxu0 %v2560
      %2641 = vmatpush1.bf16.msra.mxu0 %v2559
      %2642 = vmatprep.subr.bf16.mxu0 0
      %2643 = vmatpush2.bf16.msra.mxu0 0
      %2644 = vmatprep.subr.bf16.mxu0 0
      %2645 = vmatpush2.bf16.msra.mxu0 0
      %2646 = vmatprep.subr.bf16.mxu0 0
      %2647 = vmatpush2.bf16.msra.mxu0 0
      %2648 = vmatprep.subr.bf16.mxu0 0
      %2649 = vmatpush2.bf16.msra.mxu0 0
      %2650 = vmatprep.subr.bf16.mxu0 0
      %2651 = vmatpush2.bf16.msra.mxu0 0
      %2652 = vmatprep.subr.bf16.mxu0 0
      %2653 = vmatpush2.bf16.msra.mxu0 0
      %2654 = vmatprep.subr.bf16.mxu0 0
      %2655 = vmatpush2.bf16.msra.mxu0 0
      %2656 = vmatprep.subr.bf16.mxu0 0
      %2657 = vmatpush2.bf16.msra.mxu0 0
      %2658 = vmatprep.mubr.bf16.mxu0 0
      %2659 = vmatmul.mubr.bf16.gmra.mxu0 %v2600
      %v2660 = vpop.f32.mrf.mxu0
      %v2661 = vadd.f32 0.0, %v2660
      %v2662 = vpop.f32.mrf.mxu0
      %v2663 = vadd.f32 0.0, %v2662
      %v2664 = vpop.f32.mrf.mxu0
      %v2665 = vpop.f32.mrf.mxu0
      %2666 = vdwg.mxu0
      %2667 = vmatprep.subr.bf16.mxu0 0
      %2668 = vmatpush1.bf16.msra.mxu0 0
      %2669 = vmatprep.subr.bf16.mxu0 0
      %2670 = vmatpush1.bf16.msra.mxu0 0
      %2671 = vmatprep.subr.bf16.mxu0 0
      %2672 = vmatpush1.bf16.msra.mxu0 0
      %2673 = vmatprep.subr.bf16.mxu0 0
      %2674 = vmatpush1.bf16.msra.mxu0 0
      %2675 = vmatprep.subr.bf16.mxu0 0
      %2676 = vmatpush1.bf16.msra.mxu0 0
      %2677 = vmatprep.subr.bf16.mxu0 %v2612
      %2678 = vmatpush1.bf16.msra.mxu0 %v2609
      %2679 = vmatprep.subr.bf16.mxu0 %v2570
      %2680 = vmatpush1.bf16.msra.mxu0 %v2569
      %2681 = vmatprep.subr.bf16.mxu0 %v2562
      %2682 = vmatpush1.bf16.msra.mxu0 %v2561
      %2683 = vmatprep.subr.bf16.mxu0 0
      %2684 = vmatpush2.bf16.msra.mxu0 0
      %2685 = vmatprep.subr.bf16.mxu0 0
      %2686 = vmatpush2.bf16.msra.mxu0 0
      %2687 = vmatprep.subr.bf16.mxu0 0
      %2688 = vmatpush2.bf16.msra.mxu0 0
      %2689 = vmatprep.subr.bf16.mxu0 0
      %2690 = vmatpush2.bf16.msra.mxu0 0
      %2691 = vmatprep.subr.bf16.mxu0 0
      %2692 = vmatpush2.bf16.msra.mxu0 0
      %2693 = vmatprep.subr.bf16.mxu0 0
      %2694 = vmatpush2.bf16.msra.mxu0 0
      %2695 = vmatprep.subr.bf16.mxu0 0
      %2696 = vmatpush2.bf16.msra.mxu0 0
      %2697 = vmatprep.subr.bf16.mxu0 0
      %2698 = vmatpush2.bf16.msra.mxu0 0
      %2699 = vmatprep.mubr.bf16.mxu0 0
      %2700 = vmatmul.mubr.bf16.gmra.mxu0 %v2600
      %v2701 = vpop.f32.mrf.mxu0
      %v2702 = vadd.f32 0.0, %v2701
      %v2703 = vpop.f32.mrf.mxu0
      %v2704 = vadd.f32 0.0, %v2703
      %v2705 = vpop.f32.mrf.mxu0
      %v2706 = vpop.f32.mrf.mxu0
      %2707 = vdwg.mxu0
      %2708 = vmatprep.subr.bf16.mxu0 0
      %2709 = vmatpush1.bf16.msra.mxu0 0
      %2710 = vmatprep.subr.bf16.mxu0 0
      %2711 = vmatpush1.bf16.msra.mxu0 0
      %2712 = vmatprep.subr.bf16.mxu0 0
      %2713 = vmatpush1.bf16.msra.mxu0 0
      %2714 = vmatprep.subr.bf16.mxu0 0
      %2715 = vmatpush1.bf16.msra.mxu0 0
      %2716 = vmatprep.subr.bf16.mxu0 0
      %2717 = vmatpush1.bf16.msra.mxu0 0
      %2718 = vmatprep.subr.bf16.mxu0 %v2618
      %2719 = vmatpush1.bf16.msra.mxu0 %v2615
      %2720 = vmatprep.subr.bf16.mxu0 %v2572
      %2721 = vmatpush1.bf16.msra.mxu0 %v2571
      %2722 = vmatprep.subr.bf16.mxu0 %v2564
      %2723 = vmatpush1.bf16.msra.mxu0 %v2563
      %2724 = vmatprep.subr.bf16.mxu0 0
      %2725 = vmatpush2.bf16.msra.mxu0 0
      %2726 = vmatprep.subr.bf16.mxu0 0
      %2727 = vmatpush2.bf16.msra.mxu0 0
      %2728 = vmatprep.subr.bf16.mxu0 0
      %2729 = vmatpush2.bf16.msra.mxu0 0
      %2730 = vmatprep.subr.bf16.mxu0 0
      %2731 = vmatpush2.bf16.msra.mxu0 0
      %2732 = vmatprep.subr.bf16.mxu0 0
      %2733 = vmatpush2.bf16.msra.mxu0 0
      %2734 = vmatprep.subr.bf16.mxu0 0
      %2735 = vmatpush2.bf16.msra.mxu0 0
      %2736 = vmatprep.subr.bf16.mxu0 0
      %2737 = vmatpush2.bf16.msra.mxu0 0
      %2738 = vmatprep.subr.bf16.mxu0 0
      %2739 = vmatpush2.bf16.msra.mxu0 0
      %2740 = vmatprep.mubr.bf16.mxu0 0
      %2741 = vmatmul.mubr.bf16.gmra.mxu0 %v2600
      %v2742 = vpop.f32.mrf.mxu0
      %v2743 = vadd.f32 0.0, %v2742
      %v2744 = vpop.f32.mrf.mxu0
      %v2745 = vadd.f32 0.0, %v2744
      %v2746 = vpop.f32.mrf.mxu0
      %v2747 = vpop.f32.mrf.mxu0
      %2748 = vdwg.mxu0
      %2749 = vmatprep.subr.bf16.mxu0 0
      %2750 = vmatpush1.bf16.msra.mxu0 0
      %2751 = vmatprep.subr.bf16.mxu0 0
      %2752 = vmatpush1.bf16.msra.mxu0 0
      %2753 = vmatprep.subr.bf16.mxu0 0
      %2754 = vmatpush1.bf16.msra.mxu0 0
      %2755 = vmatprep.subr.bf16.mxu0 0
      %2756 = vmatpush1.bf16.msra.mxu0 0
      %2757 = vmatprep.subr.bf16.mxu0 0
      %2758 = vmatpush1.bf16.msra.mxu0 0
      %2759 = vmatprep.subr.bf16.mxu0 %v2624
      %2760 = vmatpush1.bf16.msra.mxu0 %v2621
      %2761 = vmatprep.subr.bf16.mxu0 %v2574
      %2762 = vmatpush1.bf16.msra.mxu0 %v2573
      %2763 = vmatprep.subr.bf16.mxu0 %v2566
      %2764 = vmatpush1.bf16.msra.mxu0 %v2565
      %2765 = vmatprep.subr.bf16.mxu0 0
      %2766 = vmatpush2.bf16.msra.mxu0 0
      %2767 = vmatprep.subr.bf16.mxu0 0
      %2768 = vmatpush2.bf16.msra.mxu0 0
      %2769 = vmatprep.subr.bf16.mxu0 0
      %2770 = vmatpush2.bf16.msra.mxu0 0
      %2771 = vmatprep.subr.bf16.mxu0 0
      %2772 = vmatpush2.bf16.msra.mxu0 0
      %2773 = vmatprep.subr.bf16.mxu0 0
      %2774 = vmatpush2.bf16.msra.mxu0 0
      %2775 = vmatprep.subr.bf16.mxu0 0
      %2776 = vmatpush2.bf16.msra.mxu0 0
      %2777 = vmatprep.subr.bf16.mxu0 0
      %2778 = vmatpush2.bf16.msra.mxu0 0
      %2779 = vmatprep.subr.bf16.mxu0 0
      %2780 = vmatpush2.bf16.msra.mxu0 0
      %2781 = vmatprep.mubr.bf16.mxu0 0
      %2782 = vmatmul.mubr.bf16.gmra.mxu0 %v2600
      %v2783 = vpop.f32.mrf.mxu0
      %v2784 = vadd.f32 0.0, %v2783
      %v2785 = vpop.f32.mrf.mxu0
      %v2786 = vadd.f32 0.0, %v2785
      %v2787 = vpop.f32.mrf.mxu0
      %v2788 = vpop.f32.mrf.mxu0
      %2789 = vdwg.mxu0
      %v2790 = vadd.f32 %v2354, %v2661
      %v2791 = vadd.f32 %v2356, %v2663
      %v2792 = vadd.f32 %v2395, %v2702
      %v2793 = vadd.f32 %v2397, %v2704
      %v2794 = vadd.f32 %v2436, %v2743
      %v2795 = vadd.f32 %v2438, %v2745
      %v2796 = vadd.f32 %v2477, %v2784
      %v2797 = vadd.f32 %v2479, %v2786
      %s2798 = scalar_lea.vmem %s2, 4
      %v2799 = vld [vmem:[%s2798] sm:$0xf]
      %2801 = vset.pattern.permute.xlu0 0
      %2802 = vperm.xlu0 %2801, %v2799
      %v2803 = vpop.permute.xlu0 %2802
      %v2805 = vadd.f32 %v2790, %v2803
      %v2806 = vadd.f32 %v2791, %v2803
      %v2807 = vadd.f32 %v2792, %v2803
      %v2808 = vadd.f32 %v2793, %v2803
      %v2809 = vadd.f32 %v2794, %v2803
      %v2810 = vadd.f32 %v2795, %v2803
      %v2811 = vadd.f32 %v2796, %v2803
      %v2812 = vadd.f32 %v2797, %v2803
      %v2817 = vadd.f32 %v2805, %v201
      %v2818 = vadd.f32 %v2806, %v209
      %v2819 = vadd.f32 %v2807, %v202
      %v2820 = vadd.f32 %v2808, %v210
      %v2821 = vadd.f32 %v2809, %v203
      %v2822 = vadd.f32 %v2810, %v211
      %v2823 = vadd.f32 %v2811, %v204
      %v2824 = vadd.f32 %v2812, %v212
      %v2825 = vmax.f32 %v2817, 0.0
      %v2826 = vmax.f32 %v2818, 0.0
      %v2827 = vmax.f32 %v2819, 0.0
      %v2828 = vmax.f32 %v2820, 0.0
      %v2829 = vmax.f32 %v2821, 0.0
      %v2830 = vmax.f32 %v2822, 0.0
      %v2831 = vmax.f32 %v2823, 0.0
      %v2832 = vmax.f32 %v2824, 0.0
      %v2833 = vsel %vm1549, %v2825, 0.0
      %v2834 = vsel %vm1550, %v2826, 0.0
      %v2835 = vsel %vm1551, %v2827, 0.0
      %v2836 = vsel %vm1552, %v2828, 0.0
      %v2837 = vsel %vm1553, %v2829, 0.0
      %v2838 = vsel %vm1554, %v2830, 0.0
      %v2839 = vsel %vm1555, %v2831, 0.0
      %v2840 = vsel %vm1556, %v2832, 0.0
      %v2849 = vcombine.low %v2833, %v2834
      %v2850 = vcombine.low %v2835, %v2836
      %v2851 = vcombine.low %v2837, %v2838
      %v2852 = vcombine.low %v2839, %v2840
      %2857 = vst [vmem:[%s197] sm:$0xff] %v2849
      %2858 = vst [vmem:[%s197 + $0x8] sm:$0xff] %v2850
      %2859 = vst [vmem:[%s197 + $0x10] sm:$0xff] %v2851
      %vm2860 = vcmask 850948
      %vm2861 = vmor %vm2860, %vm514
      %2862 = vst.msk [vmem:[%s197 + $0x18] sm:$0xff] %vm2861, %v2852
      %p2863 = scmp.lt.s32.totalorder %s15, 1
      %s2864 = scalar_select %p2863, %s15, 1
      %s2865 = smul.addr %s2864, 8
      %s2866 = smul.addr %s2865, 4
      %s2867 = scalar_lea.vmem %s4, %s2866
      // Predicated region
      $region37: #{residual_conv_block.1} parent=35 // pred_check
        %p2868 = pneg %p122
      $region38: #{residual_conv_block.1} parent=35 // pred_check_branch
        %2870 = sbr.rel (%p2868) target = $region40
      $region39: #{residual_conv_block.1} parent=35 // pred_region
        _
      $region40: #{residual_conv_block.1} parent=35 // pred_fallthru
        _
    $region36: #{residual_conv_block.1} parent=5 // pred_fallthru
      _
    %p2871 = scmp.le.s32.totalorder 2, %s10
    // Predicated region
    $region41: #{residual_conv_block.1} parent=5 // pred_check
      %p2872 = pneg %p2871
    $region42: #{residual_conv_block.1} parent=5 // pred_check_branch
      %2874 = sbr.rel (%p2872) target = $region44
    $region43: #{residual_conv_block.1} parent=5 // pred_region
      %s2875 = ssub.s32 %s10, 2
      // Predicated region
      $region45: #{residual_conv_block.1} parent=43 // pred_check
        %p2876 = pneg %p128
      $region46: #{residual_conv_block.1} parent=43 // pred_check_branch
        %2878 = sbr.rel (%p2876) target = $region48
      $region47: #{residual_conv_block.1} parent=43 // pred_region
        %p2879 = scmp.lt.s32.totalorder %s16, 1
        %s2880 = scalar_select %p2879, %s16, 1
        %s2881 = smul.addr %s2880, 8
        %s2882 = smul.addr %s2881, 4
        %s2883 = scalar_lea.vmem %s4, %s2882
      $region48: #{residual_conv_block.1} parent=43 // pred_fallthru
        _
    $region44: #{residual_conv_block.1} parent=5 // pred_fallthru
      _
  $region6: #{residual_conv_block.1} parent=0 // loop_footer
    %s14 = sadd.s32 1, %s10
  $region7: #{residual_conv_block.1} parent=0 // loop_footer_branch
    %9 = sbr.rel target = $region3
  $region8: #{residual_conv_block.1} parent=0 // loop_exit
    _

</llo_original>
